<compile_context>
chip_gen: v6e
topology: v6e:2x2x1
jax: 0.10.0
libtpu: 0.0.40
codegen_flags: <defaults>
</compile_context>

<pallas_src>
import numpy as np

import jax
import jax.numpy as jnp
from jax import lax
from jax.experimental import pallas as pl
from jax.experimental.pallas import tpu as pltpu


def _round_up(v, m):
    return ((v + m - 1) // m) * m


# ----------------------------------------------------------------------------
# Pallas kernel
# ----------------------------------------------------------------------------
def make_forward_kernel(cfg, batch_tile, layout, mm_dtype):
    nl = cfg["num_dil_conv_layers"]
    ks = cfg["dil_conv_filter_sizes"]
    dils = cfg["dil_conv_dilations"]
    L = cfg["input_length"]
    Kp = cfg["prof_conv_kernel_size"]
    last = cfg["last_dil_conv_size"]
    Bt = batch_tile
    N = Bt * L
    start = (L - last) // 2

    # per-tap offsets of the 'same'-padded dilated convs (Python constants)
    conv_offsets = []
    for i in range(nl):
        k, d = ks[i], dils[i]
        pad = (d * (k - 1)) // 2
        conv_offsets.append([t * d - pad for t in range(k)])
    distinct = sorted({o for offs in conv_offsets for o in offs if o != 0})

    def kernel(x_ref, w_ref, out_ref):
        # lane position within its batch element (computed once, reused)
        pos = lax.broadcasted_iota(jnp.int32, (1, N), 1) % L
        # hoisted boundary masks (JAX does not CSE broadcast/iota work)
        masks = {o: (pos >= max(0, -o)) & (pos < min(L, L - o)) for o in distinct}

        def shift(x, off, masked=True):
            # shifted[:, p] = x[:, p + off] within each length-L element;
            # zeros outside the element when masked.
            if off == 0:
                return x
            r = pltpu.roll(x, shift=(-off) % N, axis=1)
            return jnp.where(masks[off], r, 0) if masked else r

        # ----- dilated conv stack: im2col + ONE matmul per layer --------------
        cur = x_ref[...]                                  # (Dpad, N) f32
        dil_sum = None
        dil_out = None
        for i in range(nl):
            r0, cout, wcols = layout["conv"][i]
            cur_mm = cur.astype(mm_dtype)
            stack = jnp.concatenate(
                [shift(cur_mm, o) for o in conv_offsets[i]], axis=0)  # (k*Cin, N)
            W = w_ref[r0:r0 + cout, :wcols]
            b = w_ref[r0:r0 + cout, wcols:wcols + 1].astype(jnp.float32)
            acc = jnp.dot(W, stack, preferred_element_type=jnp.float32)
            out = jnp.maximum(acc + b, 0.0)
            dil_out = out
            if i != nl - 1:
                dil_sum = out if i == 0 else out + dil_sum
                cur = dil_sum

        dil_mm = dil_out.astype(mm_dtype)

        # ----- profile head: Kp-tap im2col, single matmul, rows padded to 8 ---
        rp, prow, pcols = layout["prof"]
        ptaps = [shift(dil_mm, start + t, masked=False) for t in range(Kp)]
        pstack = jnp.concatenate(ptaps, axis=0)           # (Kp*C_last, N)
        Wp = w_ref[rp:rp + prow, :pcols]
        bp = w_ref[rp:rp + prow, pcols:pcols + 1].astype(jnp.float32)
        prof = jnp.dot(Wp, pstack, preferred_element_type=jnp.float32) + bp
        out_ref[0:prow, :] = prof.astype(out_ref.dtype)

        # ----- count head: per-lane contributions; pooling finished in glue ---
        rc, crow, ccols = layout["count"]
        Wc = w_ref[rc:rc + crow, :ccols]
        ycnt = jnp.dot(Wc, dil_mm, preferred_element_type=jnp.float32)
        cnt_scale = jnp.where((pos >= start) & (pos < start + last),
                              1.0 / last, 0.0)
        out_ref[prow:prow + crow, :] = (ycnt * cnt_scale).astype(out_ref.dtype)

    return kernel


# ----------------------------------------------------------------------------
# Glue: parameter re-layout / algebraic folds + pallas_call wrapper
# ----------------------------------------------------------------------------
def grouped_1x1_to_dense(w, num_tasks, num_strands):
    """Grouped (groups=T) Conv1d weight (T*S, S, 1) -> (T*S, T*S) block-diagonal."""
    TS = num_tasks * num_strands
    w2 = w[:, :, 0]
    dense = jnp.zeros((TS, TS), w.dtype)
    for t in range(num_tasks):
        r0 = t * num_strands
        dense = dense.at[r0:r0 + num_strands, r0:r0 + num_strands].set(
            w2[r0:r0 + num_strands, :])
    return dense


def profile_predictor_forward(params, input_seqs, cfg, batch_tile=64,
                              matmul_dtype=jnp.float32):
    nl = cfg["num_dil_conv_layers"]
    ks = cfg["dil_conv_filter_sizes"]
    depths = cfg["dil_conv_depths"]
    T, S = cfg["num_tasks"], cfg["num_strands"]
    TS = T * S
    L, D = cfg["input_length"], cfg["input_depth"]
    O = cfg["profile_length"]
    Kp = cfg["prof_conv_kernel_size"]
    last = cfg["last_dil_conv_size"]
    C_last = depths[-1]
    start = (L - last) // 2
    B = input_seqs.shape[0]
    hp = lax.Precision.HIGHEST

    # the unmasked profile-head rolls never wrap for kept (p < O) lanes:
    assert O + start + Kp - 1 <= L, "profile taps would cross an element boundary"

    Bt = int(batch_tile)
    G = -(-B // Bt)                      # ceil(B / Bt)
    Bpad = G * Bt
    N = Bt * L
    Dpad = _round_up(D, 8)
    prof_pad = _round_up(TS, 8)

    # ---- input slab: (G, Dpad, Bt*L), lanes ordered [elem0 pos0..L-1, elem1..]
    x = jnp.transpose(input_seqs, (0, 2, 1)).astype(jnp.float32)      # (B, D, L)
    x = jnp.pad(x, ((0, Bpad - B), (0, Dpad - D), (0, 0)))
    x = x.reshape(G, Bt, Dpad, L).transpose(0, 2, 1, 3).reshape(G, Dpad, N)

    # ---- algebraic folds (exact, done once, HIGHEST precision) ---------------
    pow_w = grouped_1x1_to_dense(params["prof_one_w"], T, S)          # (TS, TS)
    cow_w = grouped_1x1_to_dense(params["count_one_w"], T, S)         # (TS, TS)

    plw = params["prof_large_w"]                                      # (TS, C_last, Kp)
    plw_f = jnp.einsum("ij,jck->ikc", pow_w, plw, precision=hp)       # (TS, Kp, C_last)
    plw2d = plw_f.reshape(TS, Kp * C_last)                            # im2col layout
    plb_f = (jnp.dot(pow_w, params["prof_large_b"][:, None], precision=hp)
             + params["prof_one_b"][:, None])                         # (TS, 1)
    prof_block = jnp.zeros((prof_pad, Kp * C_last + 1), jnp.float32)
    prof_block = prof_block.at[:TS, :Kp * C_last].set(plw2d)
    prof_block = prof_block.at[:TS, Kp * C_last:].set(plb_f)

    wc = jnp.dot(cow_w, params["count_dense_w"], precision=hp)        # (TS, C_last)
    cnt_block = jnp.zeros((prof_pad, C_last), jnp.float32).at[:TS].set(wc)
    ccb = (jnp.dot(cow_w, params["count_dense_b"][:, None], precision=hp)
           + params["count_one_b"][:, None])[:, 0]                    # (TS,), glue bias

    # ---- conv weights -> im2col (Cout, k*Cin) + bias column ------------------
    conv_blocks, conv_meta, cin_eff_list = [], [], []
    for i in range(nl):
        cin_eff = Dpad if i == 0 else depths[i - 1]
        cin_eff_list.append(cin_eff)
        w = params["conv_w"][i]                                       # (Cout, Cin, k)
        cout, cin, k = w.shape
        wp = jnp.zeros((cout, cin_eff, k), jnp.float32).at[:, :cin, :].set(w)
        w2 = jnp.transpose(wp, (0, 2, 1)).reshape(cout, k * cin_eff)  # tap-major cols
        blk = jnp.concatenate([w2, params["conv_b"][i][:, None]], axis=1)
        conv_blocks.append(blk)
        conv_meta.append((cout, k * cin_eff))

    # ---- pack ALL constants into ONE weight slab (8-aligned row offsets) -----
    blocks = conv_blocks + [prof_block, cnt_block]
    row_offs, r, max_c = [], 0, 0
    for blk in blocks:
        row_offs.append(r)
        r += _round_up(blk.shape[0], 8)
        max_c = max(max_c, blk.shape[1])
    Rslab = _round_up(r, 8)
    Cslab = _round_up(max_c, 128)
    wslab = jnp.zeros((Rslab, Cslab), jnp.float32)
    for off, blk in zip(row_offs, blocks):
        wslab = wslab.at[off:off + blk.shape[0], :blk.shape[1]].set(blk)
    wslab = wslab.astype(matmul_dtype)

    layout = {
        "conv": [(row_offs[i],) + conv_meta[i] for i in range(nl)],
        "prof": (row_offs[nl], prof_pad, Kp * C_last),
        "count": (row_offs[nl + 1], prof_pad, C_last),
    }
    out_rows = 2 * prof_pad

    in_specs = [
        pl.BlockSpec((None, Dpad, N), lambda g: (g, 0, 0)),
        pl.BlockSpec(wslab.shape, lambda g: (0, 0)),
    ]
    out_specs = pl.BlockSpec((None, out_rows, N), lambda g: (g, 0, 0))
    out_shape = jax.ShapeDtypeStruct((G, out_rows, N), jnp.float32)

    # ---- cost estimate + explicit VMEM budget (v7x 64 MiB safe) --------------
    mm_bytes = jnp.dtype(matmul_dtype).itemsize
    flops_step = 0
    for i in range(nl):
        flops_step += 2 * depths[i] * (ks[i] * cin_eff_list[i]) * N
    flops_step += 2 * prof_pad * (Kp * C_last) * N
    flops_step += 2 * prof_pad * C_last * N
    bytes_accessed = int(x.size * 4 + wslab.size * mm_bytes + G * out_rows * N * 4)
    cost = pl.CostEstimate(flops=int(G * flops_step), transcendentals=0,
                           bytes_accessed=bytes_accessed)

    stacks_bytes = (sum(ks[i] * cin_eff_list[i] for i in range(nl))
                    + Kp * C_last) * N * mm_bytes
    act_bytes = (Dpad + sum(depths) + 2 * C_last) * N * 4
    io_bytes = 2 * (Dpad * N * 4 + out_rows * N * 4) + 2 * wslab.size * mm_bytes
    vmem_est = int(2 * (stacks_bytes + act_bytes) + io_bytes)
    vmem_limit = int(min(max(vmem_est, 32 * 1024 * 1024), 48 * 1024 * 1024))

    out_slab = pl.pallas_call(
        make_forward_kernel(cfg, Bt, layout, matmul_dtype),
        out_shape=out_shape,
        grid_spec=pltpu.PrefetchScalarGridSpec(
            num_scalar_prefetch=0,
            grid=(G,),
            in_specs=in_specs,
            out_specs=out_specs),
        compiler_params=pltpu.CompilerParams(
            dimension_semantics=("parallel",),
            vmem_limit_bytes=vmem_limit),
        cost_estimate=cost,
    )(x, wslab)

    # ---- glue: crop / finish pooling, back to the PyTorch return layout ------
    prof = out_slab[:, :TS, :].reshape(G, TS, Bt, L)
    prof = prof.transpose(0, 2, 1, 3).reshape(Bpad, TS, L)[:B, :, :O]  # (B, TS, O)
    prof_pred = prof.reshape(B, T, S, O).transpose(0, 1, 3, 2)         # B x T x O x S

    cnt = out_slab[:, prof_pad:prof_pad + TS, :].reshape(G, TS, Bt, L).sum(axis=3)
    cnt = cnt.transpose(0, 2, 1).reshape(Bpad, TS)[:B] + ccb[None, :]  # (B, TS)
    count_pred = cnt.reshape(B, T, S)                                  # B x T x S
    return prof_pred, count_pred


# ----------------------------------------------------------------------------
# Deterministic parameter init (PyTorch-like uniform(-1/sqrt(fan_in), ...))
# ----------------------------------------------------------------------------
def init_params(key, cfg):
    nl = cfg["num_dil_conv_layers"]
    ks = cfg["dil_conv_filter_sizes"]
    depths = cfg["dil_conv_depths"]
    D = cfg["input_depth"]
    T, S = cfg["num_tasks"], cfg["num_strands"]
    TS = T * S
    Kp = cfg["prof_conv_kernel_size"]
    C_last = depths[-1]

    def uniform(k, shape, fan_in):
        bound = 1.0 / np.sqrt(fan_in)
        return jax.random.uniform(k, shape, jnp.float32, -bound, bound)

    keys = jax.random.split(key, 2 * nl + 8)
    ki = 0
    params = {"conv_w": [], "conv_b": []}
    for i in range(nl):
        cin = D if i == 0 else depths[i - 1]
        fan = cin * ks[i]
        params["conv_w"].append(uniform(keys[ki], (depths[i], cin, ks[i]), fan)); ki += 1
        params["conv_b"].append(uniform(keys[ki], (depths[i],), fan)); ki += 1
    params["prof_large_w"] = uniform(keys[ki], (TS, C_last, Kp), C_last * Kp); ki += 1
    params["prof_large_b"] = uniform(keys[ki], (TS,), C_last * Kp); ki += 1
    params["prof_one_w"] = uniform(keys[ki], (TS, S, 1), S); ki += 1
    params["prof_one_b"] = uniform(keys[ki], (TS,), S); ki += 1
    params["count_dense_w"] = uniform(keys[ki], (TS, C_last), C_last); ki += 1
    params["count_dense_b"] = uniform(keys[ki], (TS,), C_last); ki += 1
    params["count_one_w"] = uniform(keys[ki], (TS, S, 1), S); ki += 1
    params["count_one_b"] = uniform(keys[ki], (TS,), S); ki += 1
    return params


# ----------------------------------------------------------------------------
# Pure-JAX reference of the PyTorch forward (for correctness check)
# ----------------------------------------------------------------------------
def reference_forward(params, input_seqs, cfg):
    nl = cfg["num_dil_conv_layers"]
    ks = cfg["dil_conv_filter_sizes"]
    dils = cfg["dil_conv_dilations"]
    T, S = cfg["num_tasks"], cfg["num_strands"]
    last = cfg["last_dil_conv_size"]
    B = input_seqs.shape[0]
    dn = ("NCH", "OIH", "NCH")
    hp = lax.Precision.HIGHEST

    h = jnp.transpose(input_seqs, (0, 2, 1))
    dil_sum = None
    dil_out = None
    for i in range(nl):
        pad = (dils[i] * (ks[i] - 1)) // 2
        inp = h if i == 0 else dil_sum
        out = lax.conv_general_dilated(inp, params["conv_w"][i], (1,),
                                       [(pad, pad)], rhs_dilation=(dils[i],),
                                       dimension_numbers=dn, precision=hp)
        out = jax.nn.relu(out + params["conv_b"][i][None, :, None])
        dil_out = out
        if i != nl - 1:
            dil_sum = out if i == 0 else out + dil_sum

    start = (dil_out.shape[2] - last) // 2
    cut = dil_out[:, :, start:start + last]

    prof_large = lax.conv_general_dilated(cut, params["prof_large_w"], (1,),
                                          [(0, 0)], dimension_numbers=dn,
                                          precision=hp)
    prof_large = prof_large + params["prof_large_b"][None, :, None]
    prof_one = lax.conv_general_dilated(prof_large, params["prof_one_w"], (1,),
                                        [(0, 0)], dimension_numbers=dn,
                                        feature_group_count=T, precision=hp)
    prof_one = prof_one + params["prof_one_b"][None, :, None]
    prof_pred = prof_one.reshape(B, T, S, -1).transpose(0, 1, 3, 2)

    pooled = jnp.mean(cut, axis=2)                                      # (B, C)
    dense = jnp.dot(pooled, params["count_dense_w"].T, precision=hp)
    dense = dense + params["count_dense_b"]
    dense = dense[:, :, None]
    count_one = lax.conv_general_dilated(dense, params["count_one_w"], (1,),
                                         [(0, 0)], dimension_numbers=dn,
                                         feature_group_count=T, precision=hp)
    count_one = count_one + params["count_one_b"][None, :, None]
    count_pred = count_one.reshape(B, T, S)
    return prof_pred, count_pred


# ----------------------------------------------------------------------------
if __name__ == "__main__":
    cfg = dict(
        input_length=64,
        input_depth=4,
        profile_length=40,
        num_tasks=2,
        num_strands=2,
        num_dil_conv_layers=3,
        dil_conv_filter_sizes=[5, 3, 3],
        dil_conv_stride=1,
        dil_conv_dilations=[1, 2, 4],
        dil_conv_depths=[16, 16, 16],
        prof_conv_kernel_size=9,
        prof_conv_stride=1,
    )
    last = cfg["input_length"] - sum(
        d * (k - 1) for d, k in zip(cfg["dil_conv_dilations"],
                                    cfg["dil_conv_filter_sizes"]))
    cfg["last_dil_conv_size"] = last
    assert last - (cfg["prof_conv_kernel_size"] - 1) == cfg["profile_length"]
    for k, d in zip(cfg["dil_conv_filter_sizes"], cfg["dil_conv_dilations"]):
        assert (d * (k - 1)) % 2 == 0   # 'same'-length dilated convs

    key = jax.random.PRNGKey(0)
    kp, kx = jax.random.split(key)
    params = init_params(kp, cfg)

    B = 16
    T, S, O = cfg["num_tasks"], cfg["num_strands"], cfg["profile_length"]
    x = jax.random.normal(kx, (B, cfg["input_length"], cfg["input_depth"]),
                          jnp.float32)

    ref_prof, ref_count = reference_forward(params, x, cfg)

    # (1) fp32 MXU operands; small tile so G=2 exercises the 'parallel' grid axis
    prof_pred, count_pred = profile_predictor_forward(params, x, cfg, batch_tile=8)
    jax.block_until_ready((prof_pred, count_pred))
    assert prof_pred.shape == (B, T, O, S)
    assert count_pred.shape == (B, T, S)
    np.testing.assert_allclose(np.asarray(prof_pred), np.asarray(ref_prof),
                               atol=2e-3, rtol=2e-3)
    np.testing.assert_allclose(np.asarray(count_pred), np.asarray(ref_count),
                               atol=2e-3, rtol=2e-3)

    # (2) production-style config: default batch_tile=64 + bf16 MXU operands
    #     (f32 accumulation); looser tolerance for the bf16 operand rounding.
    prof_bf, count_bf = profile_predictor_forward(params, x, cfg,
                                                  matmul_dtype=jnp.bfloat16)
    jax.block_until_ready((prof_bf, count_bf))
    np.testing.assert_allclose(np.asarray(prof_bf), np.asarray(ref_prof),
                               atol=3e-2, rtol=3e-2)
    np.testing.assert_allclose(np.asarray(count_bf), np.asarray(ref_count),
                               atol=3e-2, rtol=3e-2)

    print("KERNEL_OK")
</pallas_src>

<mosaic_0001>
module attributes {stable_mosaic.version = 11 : i64} {
  func.func @kernel(%arg0: i32, %arg1: memref<1x8x512xf32, #tpu.memory_space<vmem>>, %arg2: memref<64x256xf32, #tpu.memory_space<vmem>>, %arg3: memref<1x16x512xf32, #tpu.memory_space<vmem>>) attributes {dimension_semantics = [#tpu.dimension_semantics<parallel>], iteration_bounds = array<i64: 2>, scalar_prefetch = 0 : i64, scratch_operands = 0 : i64, tpu.core_type = #tpu.core_type<tc>, window_params = [{transform_indices = @transform_0, window_bounds = array<i64: 1, 8, 512>}, {pipeline_mode = #tpu.pipeline_mode<synchronous>, transform_indices = @transform_1, window_bounds = array<i64: 64, 256>}, {transform_indices = @transform_2, window_bounds = array<i64: 1, 16, 512>}]} {
    %0 = tpu.iota {dimensions = array<i32: 1>} : vector<1x512xi32>
    %c64_i32 = arith.constant 64 : i32
    %c0_i32 = arith.constant 0 : i32
    %1 = arith.cmpi eq, %c64_i32, %c0_i32 : i32
    %c1_i32 = arith.constant 1 : i32
    %2 = arith.select %1, %c1_i32, %c64_i32 : i32
    %3 = vector.broadcast %2 : i32 to vector<1x512xi32>
    %4 = arith.remsi %0, %3 : vector<1x512xi32>
    %c0_i32_0 = arith.constant 0 : i32
    %5 = vector.broadcast %c0_i32_0 : i32 to vector<1x512xi32>
    %6 = arith.cmpi ne, %4, %5 : vector<1x512xi32>
    %c0_i32_1 = arith.constant 0 : i32
    %7 = vector.broadcast %c0_i32_1 : i32 to vector<1x512xi32>
    %8 = arith.cmpi slt, %4, %7 : vector<1x512xi32>
    %c0_i32_2 = arith.constant 0 : i32
    %9 = arith.cmpi slt, %2, %c0_i32_2 : i32
    %10 = vector.broadcast %9 : i1 to vector<1x512xi1>
    %11 = vector.broadcast %10 : vector<1x512xi1> to vector<1x512xi1>
    %12 = arith.xori %8, %11 : vector<1x512xi1>
    %13 = arith.andi %12, %6 : vector<1x512xi1>
    %14 = vector.broadcast %2 : i32 to vector<1x512xi32>
    %15 = arith.addi %4, %14 : vector<1x512xi32>
    %16 = arith.select %13, %15, %4 : vector<1x512xi1>, vector<1x512xi32>
    %c4_i32 = arith.constant 4 : i32
    %17 = vector.broadcast %c4_i32 : i32 to vector<1x512xi32>
    %18 = arith.cmpi sge, %16, %17 : vector<1x512xi32>
    %c64_i32_3 = arith.constant 64 : i32
    %19 = vector.broadcast %c64_i32_3 : i32 to vector<1x512xi32>
    %20 = arith.cmpi slt, %16, %19 : vector<1x512xi32>
    %21 = arith.andi %18, %20 : vector<1x512xi1>
    %c2_i32 = arith.constant 2 : i32
    %22 = vector.broadcast %c2_i32 : i32 to vector<1x512xi32>
    %23 = arith.cmpi sge, %16, %22 : vector<1x512xi32>
    %c64_i32_4 = arith.constant 64 : i32
    %24 = vector.broadcast %c64_i32_4 : i32 to vector<1x512xi32>
    %25 = arith.cmpi slt, %16, %24 : vector<1x512xi32>
    %26 = arith.andi %23, %25 : vector<1x512xi1>
    %c1_i32_5 = arith.constant 1 : i32
    %27 = vector.broadcast %c1_i32_5 : i32 to vector<1x512xi32>
    %28 = arith.cmpi sge, %16, %27 : vector<1x512xi32>
    %c64_i32_6 = arith.constant 64 : i32
    %29 = vector.broadcast %c64_i32_6 : i32 to vector<1x512xi32>
    %30 = arith.cmpi slt, %16, %29 : vector<1x512xi32>
    %31 = arith.andi %28, %30 : vector<1x512xi1>
    %c0_i32_7 = arith.constant 0 : i32
    %32 = vector.broadcast %c0_i32_7 : i32 to vector<1x512xi32>
    %33 = arith.cmpi sge, %16, %32 : vector<1x512xi32>
    %c63_i32 = arith.constant 63 : i32
    %34 = vector.broadcast %c63_i32 : i32 to vector<1x512xi32>
    %35 = arith.cmpi slt, %16, %34 : vector<1x512xi32>
    %36 = arith.andi %33, %35 : vector<1x512xi1>
    %c0_i32_8 = arith.constant 0 : i32
    %37 = vector.broadcast %c0_i32_8 : i32 to vector<1x512xi32>
    %38 = arith.cmpi sge, %16, %37 : vector<1x512xi32>
    %c62_i32 = arith.constant 62 : i32
    %39 = vector.broadcast %c62_i32 : i32 to vector<1x512xi32>
    %40 = arith.cmpi slt, %16, %39 : vector<1x512xi32>
    %41 = arith.andi %38, %40 : vector<1x512xi1>
    %c0_i32_9 = arith.constant 0 : i32
    %42 = vector.broadcast %c0_i32_9 : i32 to vector<1x512xi32>
    %43 = arith.cmpi sge, %16, %42 : vector<1x512xi32>
    %c60_i32 = arith.constant 60 : i32
    %44 = vector.broadcast %c60_i32 : i32 to vector<1x512xi32>
    %45 = arith.cmpi slt, %16, %44 : vector<1x512xi32>
    %46 = arith.andi %43, %45 : vector<1x512xi1>
    %c0 = arith.constant 0 : index
    %c0_10 = arith.constant 0 : index
    %c0_11 = arith.constant 0 : index
    %47 = vector.load %arg1[%c0, %c0_10, %c0_11] : memref<1x8x512xf32, #tpu.memory_space<vmem>>, vector<1x8x512xf32>
    %48 = vector.shape_cast %47 : vector<1x8x512xf32> to vector<8x512xf32>
    %c2_i32_12 = arith.constant 2 : i32
    %49 = tpu.dynamic_rotate %48 by %c2_i32_12 dim 1 : vector<8x512xf32>, i32 -> vector<8x512xf32>
    %c0_i32_13 = arith.constant 0 : i32
    %50 = arith.sitofp %c0_i32_13 : i32 to f32
    %51 = vector.shape_cast %26 : vector<1x512xi1> to vector<1x512xi1>
    %52 = vector.broadcast %51 : vector<1x512xi1> to vector<8x512xi1>
    %53 = vector.broadcast %50 : f32 to vector<8x512xf32>
    %54 = arith.select %52, %49, %53 : vector<8x512xi1>, vector<8x512xf32>
    %c1_i32_14 = arith.constant 1 : i32
    %55 = tpu.dynamic_rotate %48 by %c1_i32_14 dim 1 : vector<8x512xf32>, i32 -> vector<8x512xf32>
    %c0_i32_15 = arith.constant 0 : i32
    %56 = arith.sitofp %c0_i32_15 : i32 to f32
    %57 = vector.shape_cast %31 : vector<1x512xi1> to vector<1x512xi1>
    %58 = vector.broadcast %57 : vector<1x512xi1> to vector<8x512xi1>
    %59 = vector.broadcast %56 : f32 to vector<8x512xf32>
    %60 = arith.select %58, %55, %59 : vector<8x512xi1>, vector<8x512xf32>
    %c511_i32 = arith.constant 511 : i32
    %61 = tpu.dynamic_rotate %48 by %c511_i32 dim 1 : vector<8x512xf32>, i32 -> vector<8x512xf32>
    %c0_i32_16 = arith.constant 0 : i32
    %62 = arith.sitofp %c0_i32_16 : i32 to f32
    %63 = vector.shape_cast %36 : vector<1x512xi1> to vector<1x512xi1>
    %64 = vector.broadcast %63 : vector<1x512xi1> to vector<8x512xi1>
    %65 = vector.broadcast %62 : f32 to vector<8x512xf32>
    %66 = arith.select %64, %61, %65 : vector<8x512xi1>, vector<8x512xf32>
    %c510_i32 = arith.constant 510 : i32
    %67 = tpu.dynamic_rotate %48 by %c510_i32 dim 1 : vector<8x512xf32>, i32 -> vector<8x512xf32>
    %c0_i32_17 = arith.constant 0 : i32
    %68 = arith.sitofp %c0_i32_17 : i32 to f32
    %69 = vector.shape_cast %41 : vector<1x512xi1> to vector<1x512xi1>
    %70 = vector.broadcast %69 : vector<1x512xi1> to vector<8x512xi1>
    %71 = vector.broadcast %68 : f32 to vector<8x512xf32>
    %72 = arith.select %70, %67, %71 : vector<8x512xi1>, vector<8x512xf32>
    %73 = tpu.concatenate %54, %60, %48, %66, %72 in 0 : vector<8x512xf32>, vector<8x512xf32>, vector<8x512xf32>, vector<8x512xf32>, vector<8x512xf32> -> vector<40x512xf32>
    %c0_18 = arith.constant 0 : index
    %c0_19 = arith.constant 0 : index
    %74 = vector.load %arg2[%c0_18, %c0_19] : memref<64x256xf32, #tpu.memory_space<vmem>>, vector<16x40xf32>
    %c0_20 = arith.constant 0 : index
    %c40 = arith.constant 40 : index
    %75 = vector.load %arg2[%c0_20, %c40] : memref<64x256xf32, #tpu.memory_space<vmem>>, vector<16x1xf32>
    %cst = arith.constant dense<0.000000e+00> : vector<16x512xf32>
    %76 = tpu.matmul %74, %73, %cst {dimension_numbers = #tpu.dot_dimension_numbers<[1], [0], [0], [1], [0, 0, 1, 1], [], []>} : vector<16x40xf32>, vector<40x512xf32>, vector<16x512xf32> -> vector<16x512xf32>
    %77 = vector.broadcast %75 : vector<16x1xf32> to vector<16x512xf32>
    %78 = arith.addf %76, %77 : vector<16x512xf32>
    %cst_21 = arith.constant 0.000000e+00 : f32
    %79 = vector.broadcast %cst_21 : f32 to vector<16x512xf32>
    %80 = arith.maximumf %78, %79 : vector<16x512xf32>
    %c2_i32_22 = arith.constant 2 : i32
    %81 = tpu.dynamic_rotate %80 by %c2_i32_22 dim 1 : vector<16x512xf32>, i32 -> vector<16x512xf32>
    %c0_i32_23 = arith.constant 0 : i32
    %82 = arith.sitofp %c0_i32_23 : i32 to f32
    %83 = vector.shape_cast %26 : vector<1x512xi1> to vector<1x512xi1>
    %84 = vector.broadcast %83 : vector<1x512xi1> to vector<16x512xi1>
    %85 = vector.broadcast %82 : f32 to vector<16x512xf32>
    %86 = arith.select %84, %81, %85 : vector<16x512xi1>, vector<16x512xf32>
    %c510_i32_24 = arith.constant 510 : i32
    %87 = tpu.dynamic_rotate %80 by %c510_i32_24 dim 1 : vector<16x512xf32>, i32 -> vector<16x512xf32>
    %c0_i32_25 = arith.constant 0 : i32
    %88 = arith.sitofp %c0_i32_25 : i32 to f32
    %89 = vector.shape_cast %41 : vector<1x512xi1> to vector<1x512xi1>
    %90 = vector.broadcast %89 : vector<1x512xi1> to vector<16x512xi1>
    %91 = vector.broadcast %88 : f32 to vector<16x512xf32>
    %92 = arith.select %90, %87, %91 : vector<16x512xi1>, vector<16x512xf32>
    %93 = tpu.concatenate %86, %80, %92 in 0 : vector<16x512xf32>, vector<16x512xf32>, vector<16x512xf32> -> vector<48x512xf32>
    %c16 = arith.constant 16 : index
    %c0_26 = arith.constant 0 : index
    %94 = vector.load %arg2[%c16, %c0_26] : memref<64x256xf32, #tpu.memory_space<vmem>>, vector<16x48xf32>
    %c16_27 = arith.constant 16 : index
    %c48 = arith.constant 48 : index
    %95 = vector.load %arg2[%c16_27, %c48] : memref<64x256xf32, #tpu.memory_space<vmem>>, vector<16x1xf32>
    %cst_28 = arith.constant dense<0.000000e+00> : vector<16x512xf32>
    %96 = tpu.matmul %94, %93, %cst_28 {dimension_numbers = #tpu.dot_dimension_numbers<[1], [0], [0], [1], [0, 0, 1, 1], [], []>} : vector<16x48xf32>, vector<48x512xf32>, vector<16x512xf32> -> vector<16x512xf32>
    %97 = vector.broadcast %95 : vector<16x1xf32> to vector<16x512xf32>
    %98 = arith.addf %96, %97 : vector<16x512xf32>
    %cst_29 = arith.constant 0.000000e+00 : f32
    %99 = vector.broadcast %cst_29 : f32 to vector<16x512xf32>
    %100 = arith.maximumf %98, %99 : vector<16x512xf32>
    %101 = arith.addf %100, %80 : vector<16x512xf32>
    %c4_i32_30 = arith.constant 4 : i32
    %102 = tpu.dynamic_rotate %101 by %c4_i32_30 dim 1 : vector<16x512xf32>, i32 -> vector<16x512xf32>
    %c0_i32_31 = arith.constant 0 : i32
    %103 = arith.sitofp %c0_i32_31 : i32 to f32
    %104 = vector.shape_cast %21 : vector<1x512xi1> to vector<1x512xi1>
    %105 = vector.broadcast %104 : vector<1x512xi1> to vector<16x512xi1>
    %106 = vector.broadcast %103 : f32 to vector<16x512xf32>
    %107 = arith.select %105, %102, %106 : vector<16x512xi1>, vector<16x512xf32>
    %c508_i32 = arith.constant 508 : i32
    %108 = tpu.dynamic_rotate %101 by %c508_i32 dim 1 : vector<16x512xf32>, i32 -> vector<16x512xf32>
    %c0_i32_32 = arith.constant 0 : i32
    %109 = arith.sitofp %c0_i32_32 : i32 to f32
    %110 = vector.shape_cast %46 : vector<1x512xi1> to vector<1x512xi1>
    %111 = vector.broadcast %110 : vector<1x512xi1> to vector<16x512xi1>
    %112 = vector.broadcast %109 : f32 to vector<16x512xf32>
    %113 = arith.select %111, %108, %112 : vector<16x512xi1>, vector<16x512xf32>
    %114 = tpu.concatenate %107, %101, %113 in 0 : vector<16x512xf32>, vector<16x512xf32>, vector<16x512xf32> -> vector<48x512xf32>
    %c32 = arith.constant 32 : index
    %c0_33 = arith.constant 0 : index
    %115 = vector.load %arg2[%c32, %c0_33] : memref<64x256xf32, #tpu.memory_space<vmem>>, vector<16x48xf32>
    %c32_34 = arith.constant 32 : index
    %c48_35 = arith.constant 48 : index
    %116 = vector.load %arg2[%c32_34, %c48_35] : memref<64x256xf32, #tpu.memory_space<vmem>>, vector<16x1xf32>
    %cst_36 = arith.constant dense<0.000000e+00> : vector<16x512xf32>
    %117 = tpu.matmul %115, %114, %cst_36 {dimension_numbers = #tpu.dot_dimension_numbers<[1], [0], [0], [1], [0, 0, 1, 1], [], []>} : vector<16x48xf32>, vector<48x512xf32>, vector<16x512xf32> -> vector<16x512xf32>
    %118 = vector.broadcast %116 : vector<16x1xf32> to vector<16x512xf32>
    %119 = arith.addf %117, %118 : vector<16x512xf32>
    %cst_37 = arith.constant 0.000000e+00 : f32
    %120 = vector.broadcast %cst_37 : f32 to vector<16x512xf32>
    %121 = arith.maximumf %119, %120 : vector<16x512xf32>
    %c504_i32 = arith.constant 504 : i32
    %122 = tpu.dynamic_rotate %121 by %c504_i32 dim 1 : vector<16x512xf32>, i32 -> vector<16x512xf32>
    %c503_i32 = arith.constant 503 : i32
    %123 = tpu.dynamic_rotate %121 by %c503_i32 dim 1 : vector<16x512xf32>, i32 -> vector<16x512xf32>
    %c502_i32 = arith.constant 502 : i32
    %124 = tpu.dynamic_rotate %121 by %c502_i32 dim 1 : vector<16x512xf32>, i32 -> vector<16x512xf32>
    %c501_i32 = arith.constant 501 : i32
    %125 = tpu.dynamic_rotate %121 by %c501_i32 dim 1 : vector<16x512xf32>, i32 -> vector<16x512xf32>
    %c500_i32 = arith.constant 500 : i32
    %126 = tpu.dynamic_rotate %121 by %c500_i32 dim 1 : vector<16x512xf32>, i32 -> vector<16x512xf32>
    %c499_i32 = arith.constant 499 : i32
    %127 = tpu.dynamic_rotate %121 by %c499_i32 dim 1 : vector<16x512xf32>, i32 -> vector<16x512xf32>
    %c498_i32 = arith.constant 498 : i32
    %128 = tpu.dynamic_rotate %121 by %c498_i32 dim 1 : vector<16x512xf32>, i32 -> vector<16x512xf32>
    %c497_i32 = arith.constant 497 : i32
    %129 = tpu.dynamic_rotate %121 by %c497_i32 dim 1 : vector<16x512xf32>, i32 -> vector<16x512xf32>
    %c496_i32 = arith.constant 496 : i32
    %130 = tpu.dynamic_rotate %121 by %c496_i32 dim 1 : vector<16x512xf32>, i32 -> vector<16x512xf32>
    %131 = tpu.concatenate %122, %123, %124, %125, %126, %127, %128, %129, %130 in 0 : vector<16x512xf32>, vector<16x512xf32>, vector<16x512xf32>, vector<16x512xf32>, vector<16x512xf32>, vector<16x512xf32>, vector<16x512xf32>, vector<16x512xf32>, vector<16x512xf32> -> vector<144x512xf32>
    %c48_38 = arith.constant 48 : index
    %c0_39 = arith.constant 0 : index
    %132 = vector.load %arg2[%c48_38, %c0_39] : memref<64x256xf32, #tpu.memory_space<vmem>>, vector<8x144xf32>
    %c48_40 = arith.constant 48 : index
    %c144 = arith.constant 144 : index
    %133 = vector.load %arg2[%c48_40, %c144] : memref<64x256xf32, #tpu.memory_space<vmem>>, vector<8x1xf32>
    %cst_41 = arith.constant dense<0.000000e+00> : vector<8x512xf32>
    %134 = tpu.matmul %132, %131, %cst_41 {dimension_numbers = #tpu.dot_dimension_numbers<[1], [0], [0], [1], [0, 0, 1, 1], [], []>} : vector<8x144xf32>, vector<144x512xf32>, vector<8x512xf32> -> vector<8x512xf32>
    %135 = vector.broadcast %133 : vector<8x1xf32> to vector<8x512xf32>
    %136 = arith.addf %134, %135 : vector<8x512xf32>
    %c0_42 = arith.constant 0 : index
    %c0_43 = arith.constant 0 : index
    %c0_44 = arith.constant 0 : index
    %137 = vector.load %arg3[%c0_42, %c0_43, %c0_44] : memref<1x16x512xf32, #tpu.memory_space<vmem>>, vector<1x8x512xf32>
    %138 = vector.shape_cast %137 : vector<1x8x512xf32> to vector<8x512xf32>
    %139 = vector.shape_cast %136 : vector<8x512xf32> to vector<1x8x512xf32>
    tpu.vector_store %arg3[%c0_42, %c0_43, %c0_44], %139 {strides = array<i32>} : memref<1x16x512xf32, #tpu.memory_space<vmem>>, vector<1x8x512xf32>,
    %c56 = arith.constant 56 : index
    %c0_45 = arith.constant 0 : index
    %140 = vector.load %arg2[%c56, %c0_45] : memref<64x256xf32, #tpu.memory_space<vmem>>, vector<8x16xf32>
    %cst_46 = arith.constant dense<0.000000e+00> : vector<8x512xf32>
    %141 = tpu.matmul %140, %121, %cst_46 {dimension_numbers = #tpu.dot_dimension_numbers<[1], [0], [0], [1], [0, 0, 1, 1], [], []>} : vector<8x16xf32>, vector<16x512xf32>, vector<8x512xf32> -> vector<8x512xf32>
    %c8_i32 = arith.constant 8 : i32
    %142 = vector.broadcast %c8_i32 : i32 to vector<1x512xi32>
    %143 = arith.cmpi sge, %16, %142 : vector<1x512xi32>
    %c56_i32 = arith.constant 56 : i32
    %144 = vector.broadcast %c56_i32 : i32 to vector<1x512xi32>
    %145 = arith.cmpi slt, %16, %144 : vector<1x512xi32>
    %146 = arith.andi %143, %145 : vector<1x512xi1>
    %cst_47 = arith.constant 0.020833334 : f32
    %cst_48 = arith.constant 0.000000e+00 : f32
    %147 = vector.broadcast %cst_47 : f32 to vector<1x512xf32>
    %148 = vector.broadcast %cst_48 : f32 to vector<1x512xf32>
    %149 = arith.select %146, %147, %148 : vector<1x512xi1>, vector<1x512xf32>
    %150 = vector.broadcast %149 : vector<1x512xf32> to vector<8x512xf32>
    %151 = arith.mulf %141, %150 : vector<8x512xf32>
    %c0_49 = arith.constant 0 : index
    %c8 = arith.constant 8 : index
    %c0_50 = arith.constant 0 : index
    %152 = vector.load %arg3[%c0_49, %c8, %c0_50] : memref<1x16x512xf32, #tpu.memory_space<vmem>>, vector<1x8x512xf32>
    %153 = vector.shape_cast %152 : vector<1x8x512xf32> to vector<8x512xf32>
    %154 = vector.shape_cast %151 : vector<8x512xf32> to vector<1x8x512xf32>
    tpu.vector_store %arg3[%c0_49, %c8, %c0_50], %154 {strides = array<i32>} : memref<1x16x512xf32, #tpu.memory_space<vmem>>, vector<1x8x512xf32>,
    return
  }
  func.func @transform_0(%arg0: i32) -> (i32, i32, i32) {
    %c0_i32 = arith.constant 0 : i32
    %c0_i32_0 = arith.constant 0 : i32
    %c0_i32_1 = arith.constant 0 : i32
    return %arg0, %c0_i32, %c0_i32_0 : i32, i32, i32
  }
  func.func @transform_1(%arg0: i32) -> (i32, i32) {
    %c0_i32 = arith.constant 0 : i32
    %c0_i32_0 = arith.constant 0 : i32
    %c0_i32_1 = arith.constant 0 : i32
    return %c0_i32, %c0_i32_0 : i32, i32
  }
  func.func @transform_2(%arg0: i32) -> (i32, i32, i32) {
    %c0_i32 = arith.constant 0 : i32
    %c0_i32_0 = arith.constant 0 : i32
    %c0_i32_1 = arith.constant 0 : i32
    return %arg0, %c0_i32, %c0_i32_0 : i32, i32, i32
  }
}

</mosaic_0001>

<llo_original>
// kernel: tpu_custom_call.1
$region0: #{tpu_custom_call.1}
  #allocation0 [shape = 'u32[]', space=smem, size = 0x4, offset = 0x4, fixed_abs, tag = 'smem constant byte address 0x4 - core index']
  #allocation1 [shape = 'u32[144,128]{1,0:T(1,128)}', space=vmem, size = 0x12000, scoped, tag = 'internal scratch']
  %s0 = inlined_call_operand.hbm [shape: f32[2,8,512], index: 0, kind: input, shape index: {}]
  %s1 = inlined_call_operand.hbm [shape: f32[64,256], index: 1, kind: input, shape index: {}]
  %s2 = inlined_call_operand.hbm [shape: f32[2,16,512], index: 2, kind: output, shape index: {}]
  %s3 = sld [smem:[#allocation0]]
  $region49: #{tpu_custom_call.1} parent=0
    _
  %s5 = ssub.s32 1, %s3
  %s6 = scalar_select 0, %s5, %s3
  $region1: #{tpu_custom_call.1} parent=0
    #allocation2 [shape = 'u8[32768]{0}', space=vmem, size = 0x8000, scoped, tag = 'input window, operand 0']
    #allocation3 [shape = 's32[2]{0}', space=sflag, size = 0x8, scoped, tag = 'scoped memory for tpu_custom_call.1']
    #allocation4 [shape = 's32[2]{0}', space=sflag, size = 0x8, scoped, tag = 'scoped memory for tpu_custom_call.1']
    #allocation5 [shape = 'u8[65536]{0}', space=vmem, size = 0x10000, scoped, tag = 'input window, operand 1, single buffered']
    #allocation6 [shape = 's32[1]{0}', space=sflag, size = 0x4, scoped, tag = 'scoped memory for tpu_custom_call.1']
    #allocation7 [shape = 'u8[65536]{0}', space=vmem, size = 0x10000, scoped, tag = 'output window, operand 0']
    %7 = vsyncpa [#allocation3], 0
    %s8 = scalar_lea.sflag [#allocation3], 1
    %9 = vsyncpa %s8, 0
    %10 = vsyncpa [#allocation6], 0
    %11 = vsyncpa [#allocation4], 0
    %s12 = scalar_lea.sflag [#allocation4], 1
    %13 = vsyncpa %s12, 0
    loop: start=0, step=1, limit=4
    $region2: #{tpu_custom_call.1} parent=1 // loop_pre_header
      _
    $region3: #{tpu_custom_call.1} parent=1 // loop_header
      %s15 = sphi 0, %s19
      %p16 = scmp.ge.s32.totalorder %s15, 4
      %s25 = sphi 0, %s27
      %s28 = sphi 0, %s25
      %s29 = sphi 0, %s28
      %s45 = sphi 0, %s29
      %s49 = sphi 0, %s49
      %s51 = sphi 0, %s49
      %s52 = sphi 0, %s51
      %s66 = sphi 0, %s52
      %s72 = sphi 0, %s74
      %s75 = sphi 0, %s72
      %s76 = sphi 0, %s75
      %s92 = sphi 0, %s76
    $region4: #{tpu_custom_call.1} parent=1 // loop_header_branch
      %18 = sbr.rel (%p16) target = $region8
    $region5: #{tpu_custom_call.1} parent=1 // loop_body
      %s20 = ssub.s32 %s15, 1
      %s21 = ssub.s32 %s15, 2
      %s22 = sadd.s32 %s15, 1
      %s23 = ssub.s32 %s15, %s22
      %p24 = scmp.eq.s32.totalorder %s23, 0
      %s26 = sadd.s32 %s25, 1
      %s27 = scalar_select %p24, %s25, %s26
      %p30 = pneg %p24
      %p31 = scmp.eq.s32.totalorder %s15, 1
      %p32 = por %p30, %p31
      %p33 = scmp.ne.s32.totalorder %s25, %s28
      %p34 = scmp.eq.s32.totalorder %s15, 0
      %p35 = por %p33, %p34
      %p36 = scmp.ne.s32.totalorder %s25, %s28
      %p37 = scmp.eq.s32.totalorder %s20, 1
      %p38 = por %p36, %p37
      %p39 = scmp.ne.s32.totalorder %s28, %s29
      %p40 = scmp.eq.s32.totalorder %s20, 0
      %p41 = por %p39, %p40
      %p42 = scmp.ne.s32.totalorder %s28, %s29
      %p43 = scmp.eq.s32.totalorder %s21, 1
      %p44 = por %p42, %p43
      %p46 = scmp.ne.s32.totalorder %s29, %s45
      %p47 = scmp.eq.s32.totalorder %s21, 0
      %p48 = por %p46, %p47
      %s50 = sadd.s32 %s49, 1
      %p53 = scmp.eq.s32.totalorder %s15, 1
      %p54 = scmp.ne.s32.totalorder %s49, %s51
      %p55 = scmp.eq.s32.totalorder %s15, 0
      %p56 = por %p54, %p55
      %p57 = scmp.ne.s32.totalorder %s49, %s51
      %p58 = scmp.eq.s32.totalorder %s20, 1
      %p59 = por %p57, %p58
      %p60 = scmp.ne.s32.totalorder %s51, %s52
      %p61 = scmp.eq.s32.totalorder %s20, 0
      %p62 = por %p60, %p61
      %p63 = scmp.ne.s32.totalorder %s51, %s52
      %p64 = scmp.eq.s32.totalorder %s21, 1
      %p65 = por %p63, %p64
      %p67 = scmp.ne.s32.totalorder %s52, %s66
      %p68 = scmp.eq.s32.totalorder %s21, 0
      %p69 = por %p67, %p68
      %s70 = ssub.s32 %s15, %s22
      %p71 = scmp.eq.s32.totalorder %s70, 0
      %s73 = sadd.s32 %s72, 1
      %s74 = scalar_select %p71, %s72, %s73
      %p77 = pneg %p71
      %p78 = scmp.eq.s32.totalorder %s15, 1
      %p79 = por %p77, %p78
      %p80 = scmp.ne.s32.totalorder %s72, %s75
      %p81 = scmp.eq.s32.totalorder %s15, 0
      %p82 = por %p80, %p81
      %p83 = scmp.ne.s32.totalorder %s72, %s75
      %p84 = scmp.eq.s32.totalorder %s20, 1
      %p85 = por %p83, %p84
      %p86 = scmp.ne.s32.totalorder %s75, %s76
      %p87 = scmp.eq.s32.totalorder %s20, 0
      %p88 = por %p86, %p87
      %p89 = scmp.ne.s32.totalorder %s75, %s76
      %p90 = scmp.eq.s32.totalorder %s21, 1
      %p91 = por %p89, %p90
      %p93 = scmp.ne.s32.totalorder %s76, %s92
      %p94 = scmp.eq.s32.totalorder %s21, 0
      %p95 = por %p93, %p94
      %p96 = scmp.le.s32.totalorder 1, %s15
      %p97 = scmp.lt.s32.totalorder %s15, 3
      %p98 = pnand %p96, %p97
      %p99 = pneg %p98
      // Predicated region
      $region9: #{tpu_custom_call.1} parent=5 // pred_check
        _
      $region10: #{tpu_custom_call.1} parent=5 // pred_check_branch
        %101 = sbr.rel (%p98) target = $region12
      $region11: #{tpu_custom_call.1} parent=5 // pred_region
        %s102 = ssub.s32 %s15, 1
        // Predicated region
        $region13: #{tpu_custom_call.1} parent=11 // pred_check
          %p103 = pneg %p62
        $region14: #{tpu_custom_call.1} parent=11 // pred_check_branch
          %105 = sbr.rel (%p103) target = $region16
        $region15: #{tpu_custom_call.1} parent=11 // pred_region
          %s107 = ssub.s32 2048, 2048
          %108 = vsyncadd [#allocation6], %s107
          %s109 = sshll.u32 [#allocation5], 4
          %s110 = int_to_ptr.vmem [resolvable:$true] %s109
          %115 = dma.hbm_to_vmem [thread:$0]  %s1, 2048, %s110, [#allocation6], 256, 256, 16
        $region16: #{tpu_custom_call.1} parent=11 // pred_fallthru
          _
      $region12: #{tpu_custom_call.1} parent=5 // pred_fallthru
        _
      %p116 = scmp.lt.s32.totalorder %s15, 2
      // Predicated region
      $region17: #{tpu_custom_call.1} parent=5 // pred_check
        %p117 = pneg %p116
      $region18: #{tpu_custom_call.1} parent=5 // pred_check_branch
        %119 = sbr.rel (%p117) target = $region20
      $region19: #{tpu_custom_call.1} parent=5 // pred_region
        // Predicated region
        $region21: #{tpu_custom_call.1} parent=19 // pred_check
          %p120 = pneg %p35
        $region22: #{tpu_custom_call.1} parent=19 // pred_check_branch
          %122 = sbr.rel (%p120) target = $region24
        $region23: #{tpu_custom_call.1} parent=19 // pred_region
          %s123 = sand.u32 %s25, 1
          %s124 = scalar_lea.sflag [#allocation3], %s123
          %s125 = sand.u32 %s25, 1
          %s126 = smul.addr %s125, 32
          %s127 = scalar_lea.vmem [#allocation2], %s126
          %s129 = ssub.s32 512, 512
          %130 = vsyncadd %s124, %s129
          %s131 = smul.addr %s15, 4
          %s132 = smul.addr %s131, 128
          %s133 = scalar_lea.hbm %s0, %s132
          %s135 = sshll.u32 %s127, 4
          %s136 = int_to_ptr.vmem [resolvable:$true] %s135
          %138 = dma.hbm_to_vmem [thread:$0]  %s133, 512, %s136, %s124
        $region24: #{tpu_custom_call.1} parent=19 // pred_fallthru
          _
      $region20: #{tpu_custom_call.1} parent=5 // pred_fallthru
        _
      %p139 = scmp.le.s32.totalorder 1, %s15
      %p140 = scmp.lt.s32.totalorder %s15, 3
      %p141 = pnand %p139, %p140
      %p142 = pneg %p141
      // Predicated region
      $region25: #{tpu_custom_call.1} parent=5 // pred_check
        _
      $region26: #{tpu_custom_call.1} parent=5 // pred_check_branch
        %144 = sbr.rel (%p141) target = $region28
      $region27: #{tpu_custom_call.1} parent=5 // pred_region
        %s145 = ssub.s32 %s15, 1
        %s146 = sand.u32 %s28, 1
        %s147 = scalar_lea.sflag [#allocation3], %s146
        %s148 = sand.u32 %s28, 1
        %s149 = smul.addr %s148, 32
        %s150 = scalar_lea.vmem [#allocation2], %s149
        // Predicated region
        $region29: #{tpu_custom_call.1} parent=27 // pred_check
          %p151 = pneg %p41
        $region30: #{tpu_custom_call.1} parent=27 // pred_check_branch
          %153 = sbr.rel (%p151) target = $region32
        $region31: #{tpu_custom_call.1} parent=27 // pred_region
          %154 = dma.done %s147, 512
        $region32: #{tpu_custom_call.1} parent=27 // pred_fallthru
          _
        // Predicated region
        $region33: #{tpu_custom_call.1} parent=27 // pred_check
          %p155 = pneg %p62
        $region34: #{tpu_custom_call.1} parent=27 // pred_check_branch
          %157 = sbr.rel (%p155) target = $region36
        $region35: #{tpu_custom_call.1} parent=27 // pred_region
          %158 = dma.done [#allocation6], 2048
        $region36: #{tpu_custom_call.1} parent=27 // pred_fallthru
          _
        %s159 = sand.u32 %s28, 1
        %s160 = scalar_lea.sflag [#allocation3], %s159
        %s161 = sand.u32 %s28, 1
        %s162 = smul.addr %s161, 32
        %s163 = scalar_lea.vmem [#allocation2], %s162
        %p164 = pneg %p41
        %p165 = pneg %p38
        %p166 = pneg %p62
        %p167 = pneg %p59
        %p168 = pneg %p88
        %p169 = pneg %p85
        %s170 = sand.u32 %s75, 1
        %s171 = scalar_lea.sflag [#allocation4], %s170
        %s172 = sand.u32 %s75, 1
        %s173 = smul.addr %s172, 64
        %s174 = scalar_lea.vmem [#allocation7], %s173
        %v175 = vlaneseq
        %v176 = vand.u32 %v175, 127
        %v177 = vadd.s32 %v176, 128
        %v178 = vadd.s32 %v176, 256
        %v179 = vadd.s32 %v176, 384
        %vm180 = vcmp.lt.s32.totalorder %v176, 0
        %v181 = vsub.s32 0, %v176
        %v182 = vsel %vm180, %v181, %v176
        %v183 = vshrl.u32 %v182, 6
        %v184 = vand.u32 %v182, 63
        %v185 = vsub.s32 0, %v184
        %v186 = vsel %vm180, %v185, %v184
        %vm187 = vcmp.lt.s32.totalorder %v177, 0
        %v188 = vsub.s32 0, %v177
        %v189 = vsel %vm187, %v188, %v177
        %v190 = vshrl.u32 %v189, 6
        %v191 = vand.u32 %v189, 63
        %v192 = vsub.s32 0, %v191
        %v193 = vsel %vm187, %v192, %v191
        %vm194 = vcmp.lt.s32.totalorder %v178, 0
        %v195 = vsub.s32 0, %v178
        %v196 = vsel %vm194, %v195, %v178
        %v197 = vshrl.u32 %v196, 6
        %v198 = vand.u32 %v196, 63
        %v199 = vsub.s32 0, %v198
        %v200 = vsel %vm194, %v199, %v198
        %vm201 = vcmp.lt.s32.totalorder %v179, 0
        %v202 = vsub.s32 0, %v179
        %v203 = vsel %vm201, %v202, %v179
        %v204 = vshrl.u32 %v203, 6
        %v205 = vand.u32 %v203, 63
        %v206 = vsub.s32 0, %v205
        %v207 = vsel %vm201, %v206, %v205
        %vm208 = vcmp.ne.s32.totalorder %v186, 0
        %vm209 = vcmp.ne.s32.totalorder %v193, 0
        %vm210 = vcmp.ne.s32.totalorder %v200, 0
        %vm211 = vcmp.ne.s32.totalorder %v207, 0
        %vm212 = vcmp.lt.s32.totalorder %v186, 0
        %vm213 = vcmp.lt.s32.totalorder %v193, 0
        %vm214 = vcmp.lt.s32.totalorder %v200, 0
        %vm215 = vcmp.lt.s32.totalorder %v207, 0
        %vm216 = vmand %vm212, %vm208
        %vm217 = vmand %vm213, %vm209
        %vm218 = vmand %vm214, %vm210
        %vm219 = vmand %vm215, %vm211
        %v220 = vadd.s32 %v186, 64
        %v221 = vadd.s32 %v193, 64
        %v222 = vadd.s32 %v200, 64
        %v223 = vadd.s32 %v207, 64
        %v224 = vsel %vm216, %v220, %v186
        %v225 = vsel %vm217, %v221, %v193
        %v226 = vsel %vm218, %v222, %v200
        %v227 = vsel %vm219, %v223, %v207
        %vm228 = vcmp.ge.s32.totalorder %v224, 4
        %vm229 = vcmp.ge.s32.totalorder %v225, 4
        %vm230 = vcmp.ge.s32.totalorder %v226, 4
        %vm231 = vcmp.ge.s32.totalorder %v227, 4
        %vm232 = vcmp.lt.s32.totalorder %v224, 64
        %vm233 = vcmp.lt.s32.totalorder %v225, 64
        %vm234 = vcmp.lt.s32.totalorder %v226, 64
        %vm235 = vcmp.lt.s32.totalorder %v227, 64
        %vm236 = vmand %vm228, %vm232
        %vm237 = vmand %vm229, %vm233
        %vm238 = vmand %vm230, %vm234
        %vm239 = vmand %vm231, %vm235
        %vm240 = vcmp.ge.s32.totalorder %v224, 2
        %vm241 = vcmp.ge.s32.totalorder %v225, 2
        %vm242 = vcmp.ge.s32.totalorder %v226, 2
        %vm243 = vcmp.ge.s32.totalorder %v227, 2
        %vm244 = vmand %vm240, %vm232
        %vm245 = vmand %vm241, %vm233
        %vm246 = vmand %vm242, %vm234
        %vm247 = vmand %vm243, %vm235
        %vm248 = vcmp.ge.s32.totalorder %v224, 1
        %vm249 = vcmp.ge.s32.totalorder %v225, 1
        %vm250 = vcmp.ge.s32.totalorder %v226, 1
        %vm251 = vcmp.ge.s32.totalorder %v227, 1
        %vm252 = vmand %vm248, %vm232
        %vm253 = vmand %vm249, %vm233
        %vm254 = vmand %vm250, %vm234
        %vm255 = vmand %vm251, %vm235
        %vm256 = vcmp.ge.s32.totalorder %v224, 0
        %vm257 = vcmp.ge.s32.totalorder %v225, 0
        %vm258 = vcmp.ge.s32.totalorder %v226, 0
        %vm259 = vcmp.ge.s32.totalorder %v227, 0
        %vm260 = vcmp.lt.s32.totalorder %v224, 63
        %vm261 = vcmp.lt.s32.totalorder %v225, 63
        %vm262 = vcmp.lt.s32.totalorder %v226, 63
        %vm263 = vcmp.lt.s32.totalorder %v227, 63
        %vm264 = vmand %vm256, %vm260
        %vm265 = vmand %vm257, %vm261
        %vm266 = vmand %vm258, %vm262
        %vm267 = vmand %vm259, %vm263
        %vm268 = vcmp.lt.s32.totalorder %v224, 62
        %vm269 = vcmp.lt.s32.totalorder %v225, 62
        %vm270 = vcmp.lt.s32.totalorder %v226, 62
        %vm271 = vcmp.lt.s32.totalorder %v227, 62
        %vm272 = vmand %vm256, %vm268
        %vm273 = vmand %vm257, %vm269
        %vm274 = vmand %vm258, %vm270
        %vm275 = vmand %vm259, %vm271
        %vm276 = vcmp.lt.s32.totalorder %v224, 60
        %vm277 = vcmp.lt.s32.totalorder %v225, 60
        %vm278 = vcmp.lt.s32.totalorder %v226, 60
        %vm279 = vcmp.lt.s32.totalorder %v227, 60
        %vm280 = vmand %vm256, %vm276
        %vm281 = vmand %vm257, %vm277
        %vm282 = vmand %vm258, %vm278
        %vm283 = vmand %vm259, %vm279
        %v284 = vld [vmem:[%s150] sm:$0xff]
        %v285 = vld [vmem:[%s150 + $0x8] sm:$0xff]
        %v286 = vld [vmem:[%s150 + $0x10] sm:$0xff]
        %v287 = vld [vmem:[%s150 + $0x18] sm:$0xff]
        %288 = vrot.lane.b32.xlu0 %v284, 2
        %v289 = vpop.permute.xlu0 %288
        %290 = vrot.lane.b32.xlu0 %v285, 2
        %v291 = vpop.permute.xlu0 %290
        %292 = vrot.lane.b32.xlu0 %v286, 2
        %v293 = vpop.permute.xlu0 %292
        %294 = vrot.lane.b32.xlu0 %v287, 2
        %v295 = vpop.permute.xlu0 %294
        %vm296 = vcmp.lt.s32.totalorder %v176, 2
        %v297 = vsel %vm296, %v293, %v295
        %v298 = vsel %vm296, %v291, %v293
        %v299 = vsel %vm296, %v289, %v291
        %v300 = vsel %vm296, %v295, %v289
        %v301 = vsel %vm244, 1, 0
        %v302 = vsel %vm245, 1, 0
        %v303 = vsel %vm246, 1, 0
        %v304 = vsel %vm247, 1, 0
        %vm305 = vcmp.eq.s32.totalorder %v301, 1
        %vm306 = vcmp.eq.s32.totalorder %v302, 1
        %vm307 = vcmp.eq.s32.totalorder %v303, 1
        %vm308 = vcmp.eq.s32.totalorder %v304, 1
        %v309 = vsel %vm305, %v300, 0.0
        %v310 = vsel %vm306, %v299, 0.0
        %v311 = vsel %vm307, %v298, 0.0
        %v312 = vsel %vm308, %v297, 0.0
        %313 = vrot.lane.b32.xlu0 %v284, 1
        %v314 = vpop.permute.xlu0 %313
        %315 = vrot.lane.b32.xlu0 %v285, 1
        %v316 = vpop.permute.xlu0 %315
        %317 = vrot.lane.b32.xlu0 %v286, 1
        %v318 = vpop.permute.xlu0 %317
        %319 = vrot.lane.b32.xlu0 %v287, 1
        %v320 = vpop.permute.xlu0 %319
        %vm321 = vcmp.lt.s32.totalorder %v176, 1
        %v322 = vsel %vm321, %v318, %v320
        %v323 = vsel %vm321, %v316, %v318
        %v324 = vsel %vm321, %v314, %v316
        %v325 = vsel %vm321, %v320, %v314
        %v326 = vsel %vm252, 1, 0
        %v327 = vsel %vm253, 1, 0
        %v328 = vsel %vm254, 1, 0
        %v329 = vsel %vm255, 1, 0
        %vm330 = vcmp.eq.s32.totalorder %v326, 1
        %vm331 = vcmp.eq.s32.totalorder %v327, 1
        %vm332 = vcmp.eq.s32.totalorder %v328, 1
        %vm333 = vcmp.eq.s32.totalorder %v329, 1
        %v334 = vsel %vm330, %v325, 0.0
        %v335 = vsel %vm331, %v324, 0.0
        %v336 = vsel %vm332, %v323, 0.0
        %v337 = vsel %vm333, %v322, 0.0
        %338 = vrot.lane.b32.xlu0 %v284, 127
        %v339 = vpop.permute.xlu0 %338
        %340 = vrot.lane.b32.xlu0 %v285, 127
        %v341 = vpop.permute.xlu0 %340
        %342 = vrot.lane.b32.xlu0 %v286, 127
        %v343 = vpop.permute.xlu0 %342
        %344 = vrot.lane.b32.xlu0 %v287, 127
        %v345 = vpop.permute.xlu0 %344
        %vm346 = vcmp.lt.s32.totalorder %v176, 127
        %v347 = vsel %vm346, %v343, %v345
        %v348 = vsel %vm346, %v341, %v343
        %v349 = vsel %vm346, %v339, %v341
        %v350 = vsel %vm346, %v345, %v339
        %v351 = vsel %vm264, 1, 0
        %v352 = vsel %vm265, 1, 0
        %v353 = vsel %vm266, 1, 0
        %v354 = vsel %vm267, 1, 0
        %vm355 = vcmp.eq.s32.totalorder %v351, 1
        %vm356 = vcmp.eq.s32.totalorder %v352, 1
        %vm357 = vcmp.eq.s32.totalorder %v353, 1
        %vm358 = vcmp.eq.s32.totalorder %v354, 1
        %v359 = vsel %vm355, %v349, 0.0
        %v360 = vsel %vm356, %v348, 0.0
        %v361 = vsel %vm357, %v347, 0.0
        %v362 = vsel %vm358, %v350, 0.0
        %363 = vrot.lane.b32.xlu0 %v284, 126
        %v364 = vpop.permute.xlu0 %363
        %365 = vrot.lane.b32.xlu0 %v285, 126
        %v366 = vpop.permute.xlu0 %365
        %367 = vrot.lane.b32.xlu0 %v286, 126
        %v368 = vpop.permute.xlu0 %367
        %369 = vrot.lane.b32.xlu0 %v287, 126
        %v370 = vpop.permute.xlu0 %369
        %vm371 = vcmp.lt.s32.totalorder %v176, 126
        %v372 = vsel %vm371, %v368, %v370
        %v373 = vsel %vm371, %v366, %v368
        %v374 = vsel %vm371, %v364, %v366
        %v375 = vsel %vm371, %v370, %v364
        %v376 = vsel %vm272, 1, 0
        %v377 = vsel %vm273, 1, 0
        %v378 = vsel %vm274, 1, 0
        %v379 = vsel %vm275, 1, 0
        %vm380 = vcmp.eq.s32.totalorder %v376, 1
        %vm381 = vcmp.eq.s32.totalorder %v377, 1
        %vm382 = vcmp.eq.s32.totalorder %v378, 1
        %vm383 = vcmp.eq.s32.totalorder %v379, 1
        %v384 = vsel %vm380, %v374, 0.0
        %v385 = vsel %vm381, %v373, 0.0
        %v386 = vsel %vm382, %v372, 0.0
        %v387 = vsel %vm383, %v375, 0.0
        %v388 = vld [vmem:[#allocation5] sm:$0xff]
        %v389 = vld [vmem:[#allocation5 + $0x10] sm:$0xff]
        %391 = vset.pattern.permute.xlu0 40
        %392 = vperm.xlu0 %391, %v388
        %v393 = vpop.permute.xlu0 %392
        %396 = vset.pattern.permute.xlu0 40
        %397 = vperm.xlu0 %396, %v389
        %v398 = vpop.permute.xlu0 %397
        %vm400 = vcmask 326656
        %v401 = vsel %vm400, %v388, 0
        %v403 = vsel %vm400, %v389, 0
        %405 = vmatprep.subr.mxu0 0.0
        %406 = vmatpush1.msra.mxu0 0.0
        %407 = vmatprep.subr.mxu0 0.0
        %408 = vmatpush1.msra.mxu0 0.0
        %409 = vmatprep.subr.mxu0 0.0
        %410 = vmatpush1.msra.mxu0 0.0
        %411 = vmatprep.subr.mxu0 0.0
        %412 = vmatpush1.msra.mxu0 0.0
        %413 = vmatprep.subr.mxu0 0.0
        %414 = vmatpush1.msra.mxu0 0.0
        %415 = vmatprep.subr.mxu0 0.0
        %416 = vmatpush1.msra.mxu0 0.0
        %417 = vmatprep.subr.mxu0 0.0
        %418 = vmatpush1.msra.mxu0 0.0
        %419 = vmatprep.subr.mxu0 0.0
        %420 = vmatpush1.msra.mxu0 0.0
        %421 = vmatprep.subr.mxu0 0.0
        %422 = vmatpush1.msra.mxu0 0.0
        %423 = vmatprep.subr.mxu0 0.0
        %424 = vmatpush1.msra.mxu0 0.0
        %425 = vmatprep.subr.mxu0 0.0
        %426 = vmatpush1.msra.mxu0 0.0
        %427 = vmatprep.subr.mxu0 %v385
        %428 = vmatpush1.msra.mxu0 %v384
        %429 = vmatprep.subr.mxu0 %v360
        %430 = vmatpush1.msra.mxu0 %v359
        %431 = vmatprep.subr.mxu0 %v285
        %432 = vmatpush1.msra.mxu0 %v284
        %433 = vmatprep.subr.mxu0 %v335
        %434 = vmatpush1.msra.mxu0 %v334
        %435 = vmatprep.subr.mxu0 %v310
        %436 = vmatpush1.msra.mxu0 %v309
        %437 = vmatprep.subr.mxu0 0.0
        %438 = vmatpush2.msra.mxu0 0.0
        %439 = vmatprep.subr.mxu0 0.0
        %440 = vmatpush2.msra.mxu0 0.0
        %441 = vmatprep.subr.mxu0 0.0
        %442 = vmatpush2.msra.mxu0 0.0
        %443 = vmatprep.subr.mxu0 0.0
        %444 = vmatpush2.msra.mxu0 0.0
        %445 = vmatprep.subr.mxu0 0.0
        %446 = vmatpush2.msra.mxu0 0.0
        %447 = vmatprep.subr.mxu0 0.0
        %448 = vmatpush2.msra.mxu0 0.0
        %449 = vmatprep.subr.mxu0 0.0
        %450 = vmatpush2.msra.mxu0 0.0
        %451 = vmatprep.subr.mxu0 0.0
        %452 = vmatpush2.msra.mxu0 0.0
        %453 = vmatprep.subr.mxu0 0.0
        %454 = vmatpush2.msra.mxu0 0.0
        %455 = vmatprep.subr.mxu0 0.0
        %456 = vmatpush2.msra.mxu0 0.0
        %457 = vmatprep.subr.mxu0 0.0
        %458 = vmatpush2.msra.mxu0 0.0
        %459 = vmatprep.subr.mxu0 0.0
        %460 = vmatpush2.msra.mxu0 0.0
        %461 = vmatprep.subr.mxu0 0.0
        %462 = vmatpush2.msra.mxu0 0.0
        %463 = vmatprep.subr.mxu0 0.0
        %464 = vmatpush2.msra.mxu0 0.0
        %465 = vmatprep.subr.mxu0 0.0
        %466 = vmatpush2.msra.mxu0 0.0
        %467 = vmatprep.subr.mxu0 0.0
        %468 = vmatpush2.msra.mxu0 0.0
        %469 = vmatprep.mubr.f32.mxu0 0.0
        %470 = vmatmul.mubr.f32.gmra.mxu0 %v401
        %v471 = vpop.f32.mrf.mxu0
        %v472 = vadd.f32 %v393, %v471
        %v473 = vpop.f32.mrf.mxu0
        %v474 = vadd.f32 %v393, %v473
        %475 = vmatprep.mubr.f32.mxu0 0.0
        %476 = vmatmul.mubr.f32.gmra.mxu0 %v403
        %v477 = vpop.f32.mrf.mxu0
        %v478 = vadd.f32 %v398, %v477
        %v479 = vpop.f32.mrf.mxu0
        %v480 = vadd.f32 %v398, %v479
        %481 = vdwg.mxu0
        %482 = vmatprep.subr.mxu0 0.0
        %483 = vmatpush1.msra.mxu0 0.0
        %484 = vmatprep.subr.mxu0 0.0
        %485 = vmatpush1.msra.mxu0 0.0
        %486 = vmatprep.subr.mxu0 0.0
        %487 = vmatpush1.msra.mxu0 0.0
        %488 = vmatprep.subr.mxu0 0.0
        %489 = vmatpush1.msra.mxu0 0.0
        %490 = vmatprep.subr.mxu0 0.0
        %491 = vmatpush1.msra.mxu0 0.0
        %492 = vmatprep.subr.mxu0 0.0
        %493 = vmatpush1.msra.mxu0 0.0
        %494 = vmatprep.subr.mxu0 0.0
        %495 = vmatpush1.msra.mxu0 0.0
        %496 = vmatprep.subr.mxu0 0.0
        %497 = vmatpush1.msra.mxu0 0.0
        %498 = vmatprep.subr.mxu0 0.0
        %499 = vmatpush1.msra.mxu0 0.0
        %500 = vmatprep.subr.mxu0 0.0
        %501 = vmatpush1.msra.mxu0 0.0
        %502 = vmatprep.subr.mxu0 0.0
        %503 = vmatpush1.msra.mxu0 0.0
        %504 = vmatprep.subr.mxu0 %v387
        %505 = vmatpush1.msra.mxu0 %v386
        %506 = vmatprep.subr.mxu0 %v362
        %507 = vmatpush1.msra.mxu0 %v361
        %508 = vmatprep.subr.mxu0 %v287
        %509 = vmatpush1.msra.mxu0 %v286
        %510 = vmatprep.subr.mxu0 %v337
        %511 = vmatpush1.msra.mxu0 %v336
        %512 = vmatprep.subr.mxu0 %v312
        %513 = vmatpush1.msra.mxu0 %v311
        %514 = vmatprep.subr.mxu0 0.0
        %515 = vmatpush2.msra.mxu0 0.0
        %516 = vmatprep.subr.mxu0 0.0
        %517 = vmatpush2.msra.mxu0 0.0
        %518 = vmatprep.subr.mxu0 0.0
        %519 = vmatpush2.msra.mxu0 0.0
        %520 = vmatprep.subr.mxu0 0.0
        %521 = vmatpush2.msra.mxu0 0.0
        %522 = vmatprep.subr.mxu0 0.0
        %523 = vmatpush2.msra.mxu0 0.0
        %524 = vmatprep.subr.mxu0 0.0
        %525 = vmatpush2.msra.mxu0 0.0
        %526 = vmatprep.subr.mxu0 0.0
        %527 = vmatpush2.msra.mxu0 0.0
        %528 = vmatprep.subr.mxu0 0.0
        %529 = vmatpush2.msra.mxu0 0.0
        %530 = vmatprep.subr.mxu0 0.0
        %531 = vmatpush2.msra.mxu0 0.0
        %532 = vmatprep.subr.mxu0 0.0
        %533 = vmatpush2.msra.mxu0 0.0
        %534 = vmatprep.subr.mxu0 0.0
        %535 = vmatpush2.msra.mxu0 0.0
        %536 = vmatprep.subr.mxu0 0.0
        %537 = vmatpush2.msra.mxu0 0.0
        %538 = vmatprep.subr.mxu0 0.0
        %539 = vmatpush2.msra.mxu0 0.0
        %540 = vmatprep.subr.mxu0 0.0
        %541 = vmatpush2.msra.mxu0 0.0
        %542 = vmatprep.subr.mxu0 0.0
        %543 = vmatpush2.msra.mxu0 0.0
        %544 = vmatprep.subr.mxu0 0.0
        %545 = vmatpush2.msra.mxu0 0.0
        %546 = vmatprep.mubr.f32.mxu0 0.0
        %547 = vmatmul.mubr.f32.gmra.mxu0 %v401
        %v548 = vpop.f32.mrf.mxu0
        %v549 = vadd.f32 %v393, %v548
        %v550 = vpop.f32.mrf.mxu0
        %v551 = vadd.f32 %v393, %v550
        %552 = vmatprep.mubr.f32.mxu0 0.0
        %553 = vmatmul.mubr.f32.gmra.mxu0 %v403
        %v554 = vpop.f32.mrf.mxu0
        %v555 = vadd.f32 %v398, %v554
        %v556 = vpop.f32.mrf.mxu0
        %v557 = vadd.f32 %v398, %v556
        %558 = vdwg.mxu0
        %v559 = vmax.f32 %v472, 0.0
        %v560 = vmax.f32 %v474, 0.0
        %v561 = vmax.f32 %v549, 0.0
        %v562 = vmax.f32 %v551, 0.0
        %v563 = vmax.f32 %v478, 0.0
        %v564 = vmax.f32 %v480, 0.0
        %v565 = vmax.f32 %v555, 0.0
        %v566 = vmax.f32 %v557, 0.0
        %567 = vrot.lane.b32.xlu0 %v559, 2
        %v568 = vpop.permute.xlu0 %567
        %569 = vrot.lane.b32.xlu0 %v563, 2
        %v570 = vpop.permute.xlu0 %569
        %571 = vrot.lane.b32.xlu0 %v560, 2
        %v572 = vpop.permute.xlu0 %571
        %573 = vrot.lane.b32.xlu0 %v564, 2
        %v574 = vpop.permute.xlu0 %573
        %575 = vrot.lane.b32.xlu0 %v561, 2
        %v576 = vpop.permute.xlu0 %575
        %577 = vrot.lane.b32.xlu0 %v565, 2
        %v578 = vpop.permute.xlu0 %577
        %579 = vrot.lane.b32.xlu0 %v562, 2
        %v580 = vpop.permute.xlu0 %579
        %581 = vrot.lane.b32.xlu0 %v566, 2
        %v582 = vpop.permute.xlu0 %581
        %v583 = vsel %vm296, %v576, %v580
        %v584 = vsel %vm296, %v578, %v582
        %v585 = vsel %vm296, %v572, %v576
        %v586 = vsel %vm296, %v574, %v578
        %v587 = vsel %vm296, %v568, %v572
        %v588 = vsel %vm296, %v570, %v574
        %v589 = vsel %vm296, %v580, %v568
        %v590 = vsel %vm296, %v582, %v570
        %v591 = vsel %vm305, %v589, 0.0
        %v592 = vsel %vm306, %v587, 0.0
        %v593 = vsel %vm307, %v585, 0.0
        %v594 = vsel %vm308, %v583, 0.0
        %v595 = vsel %vm305, %v590, 0.0
        %v596 = vsel %vm306, %v588, 0.0
        %v597 = vsel %vm307, %v586, 0.0
        %v598 = vsel %vm308, %v584, 0.0
        %599 = vrot.lane.b32.xlu0 %v559, 126
        %v600 = vpop.permute.xlu0 %599
        %601 = vrot.lane.b32.xlu0 %v563, 126
        %v602 = vpop.permute.xlu0 %601
        %603 = vrot.lane.b32.xlu0 %v560, 126
        %v604 = vpop.permute.xlu0 %603
        %605 = vrot.lane.b32.xlu0 %v564, 126
        %v606 = vpop.permute.xlu0 %605
        %607 = vrot.lane.b32.xlu0 %v561, 126
        %v608 = vpop.permute.xlu0 %607
        %609 = vrot.lane.b32.xlu0 %v565, 126
        %v610 = vpop.permute.xlu0 %609
        %611 = vrot.lane.b32.xlu0 %v562, 126
        %v612 = vpop.permute.xlu0 %611
        %613 = vrot.lane.b32.xlu0 %v566, 126
        %v614 = vpop.permute.xlu0 %613
        %v615 = vsel %vm371, %v608, %v612
        %v616 = vsel %vm371, %v610, %v614
        %v617 = vsel %vm371, %v604, %v608
        %v618 = vsel %vm371, %v606, %v610
        %v619 = vsel %vm371, %v600, %v604
        %v620 = vsel %vm371, %v602, %v606
        %v621 = vsel %vm371, %v612, %v600
        %v622 = vsel %vm371, %v614, %v602
        %v623 = vsel %vm380, %v619, 0.0
        %v624 = vsel %vm381, %v617, 0.0
        %v625 = vsel %vm382, %v615, 0.0
        %v626 = vsel %vm383, %v621, 0.0
        %v627 = vsel %vm380, %v620, 0.0
        %v628 = vsel %vm381, %v618, 0.0
        %v629 = vsel %vm382, %v616, 0.0
        %v630 = vsel %vm383, %v622, 0.0
        %v631 = vld [vmem:[#allocation5 + $0x20] sm:$0xff]
        %v632 = vld [vmem:[#allocation5 + $0x30] sm:$0xff]
        %634 = vset.pattern.permute.xlu0 48
        %635 = vperm.xlu0 %634, %v631
        %v636 = vpop.permute.xlu0 %635
        %639 = vset.pattern.permute.xlu0 48
        %640 = vperm.xlu0 %639, %v632
        %v641 = vpop.permute.xlu0 %640
        %vm643 = vcmask 392192
        %v644 = vsel %vm643, %v631, 0
        %v646 = vsel %vm643, %v632, 0
        %648 = vmatprep.subr.mxu0 0.0
        %649 = vmatpush1.msra.mxu0 0.0
        %650 = vmatprep.subr.mxu0 0.0
        %651 = vmatpush1.msra.mxu0 0.0
        %652 = vmatprep.subr.mxu0 0.0
        %653 = vmatpush1.msra.mxu0 0.0
        %654 = vmatprep.subr.mxu0 0.0
        %655 = vmatpush1.msra.mxu0 0.0
        %656 = vmatprep.subr.mxu0 0.0
        %657 = vmatpush1.msra.mxu0 0.0
        %658 = vmatprep.subr.mxu0 0.0
        %659 = vmatpush1.msra.mxu0 0.0
        %660 = vmatprep.subr.mxu0 0.0
        %661 = vmatpush1.msra.mxu0 0.0
        %662 = vmatprep.subr.mxu0 0.0
        %663 = vmatpush1.msra.mxu0 0.0
        %664 = vmatprep.subr.mxu0 0.0
        %665 = vmatpush1.msra.mxu0 0.0
        %666 = vmatprep.subr.mxu0 0.0
        %667 = vmatpush1.msra.mxu0 0.0
        %668 = vmatprep.subr.mxu0 %v628
        %669 = vmatpush1.msra.mxu0 %v627
        %670 = vmatprep.subr.mxu0 %v624
        %671 = vmatpush1.msra.mxu0 %v623
        %672 = vmatprep.subr.mxu0 %v564
        %673 = vmatpush1.msra.mxu0 %v563
        %674 = vmatprep.subr.mxu0 %v560
        %675 = vmatpush1.msra.mxu0 %v559
        %676 = vmatprep.subr.mxu0 %v596
        %677 = vmatpush1.msra.mxu0 %v595
        %678 = vmatprep.subr.mxu0 %v592
        %679 = vmatpush1.msra.mxu0 %v591
        %680 = vmatprep.subr.mxu0 0.0
        %681 = vmatpush2.msra.mxu0 0.0
        %682 = vmatprep.subr.mxu0 0.0
        %683 = vmatpush2.msra.mxu0 0.0
        %684 = vmatprep.subr.mxu0 0.0
        %685 = vmatpush2.msra.mxu0 0.0
        %686 = vmatprep.subr.mxu0 0.0
        %687 = vmatpush2.msra.mxu0 0.0
        %688 = vmatprep.subr.mxu0 0.0
        %689 = vmatpush2.msra.mxu0 0.0
        %690 = vmatprep.subr.mxu0 0.0
        %691 = vmatpush2.msra.mxu0 0.0
        %692 = vmatprep.subr.mxu0 0.0
        %693 = vmatpush2.msra.mxu0 0.0
        %694 = vmatprep.subr.mxu0 0.0
        %695 = vmatpush2.msra.mxu0 0.0
        %696 = vmatprep.subr.mxu0 0.0
        %697 = vmatpush2.msra.mxu0 0.0
        %698 = vmatprep.subr.mxu0 0.0
        %699 = vmatpush2.msra.mxu0 0.0
        %700 = vmatprep.subr.mxu0 0.0
        %701 = vmatpush2.msra.mxu0 0.0
        %702 = vmatprep.subr.mxu0 0.0
        %703 = vmatpush2.msra.mxu0 0.0
        %704 = vmatprep.subr.mxu0 0.0
        %705 = vmatpush2.msra.mxu0 0.0
        %706 = vmatprep.subr.mxu0 0.0
        %707 = vmatpush2.msra.mxu0 0.0
        %708 = vmatprep.subr.mxu0 0.0
        %709 = vmatpush2.msra.mxu0 0.0
        %710 = vmatprep.subr.mxu0 0.0
        %711 = vmatpush2.msra.mxu0 0.0
        %712 = vmatprep.mubr.f32.mxu0 0.0
        %713 = vmatmul.mubr.f32.gmra.mxu0 %v644
        %v714 = vpop.f32.mrf.mxu0
        %v715 = vadd.f32 %v636, %v714
        %v716 = vpop.f32.mrf.mxu0
        %v717 = vadd.f32 %v636, %v716
        %718 = vmatprep.mubr.f32.mxu0 0.0
        %719 = vmatmul.mubr.f32.gmra.mxu0 %v646
        %v720 = vpop.f32.mrf.mxu0
        %v721 = vadd.f32 %v641, %v720
        %v722 = vpop.f32.mrf.mxu0
        %v723 = vadd.f32 %v641, %v722
        %724 = vdwg.mxu0
        %725 = vmatprep.subr.mxu0 0.0
        %726 = vmatpush1.msra.mxu0 0.0
        %727 = vmatprep.subr.mxu0 0.0
        %728 = vmatpush1.msra.mxu0 0.0
        %729 = vmatprep.subr.mxu0 0.0
        %730 = vmatpush1.msra.mxu0 0.0
        %731 = vmatprep.subr.mxu0 0.0
        %732 = vmatpush1.msra.mxu0 0.0
        %733 = vmatprep.subr.mxu0 0.0
        %734 = vmatpush1.msra.mxu0 0.0
        %735 = vmatprep.subr.mxu0 0.0
        %736 = vmatpush1.msra.mxu0 0.0
        %737 = vmatprep.subr.mxu0 0.0
        %738 = vmatpush1.msra.mxu0 0.0
        %739 = vmatprep.subr.mxu0 0.0
        %740 = vmatpush1.msra.mxu0 0.0
        %741 = vmatprep.subr.mxu0 0.0
        %742 = vmatpush1.msra.mxu0 0.0
        %743 = vmatprep.subr.mxu0 0.0
        %744 = vmatpush1.msra.mxu0 0.0
        %745 = vmatprep.subr.mxu0 %v630
        %746 = vmatpush1.msra.mxu0 %v629
        %747 = vmatprep.subr.mxu0 %v626
        %748 = vmatpush1.msra.mxu0 %v625
        %749 = vmatprep.subr.mxu0 %v566
        %750 = vmatpush1.msra.mxu0 %v565
        %751 = vmatprep.subr.mxu0 %v562
        %752 = vmatpush1.msra.mxu0 %v561
        %753 = vmatprep.subr.mxu0 %v598
        %754 = vmatpush1.msra.mxu0 %v597
        %755 = vmatprep.subr.mxu0 %v594
        %756 = vmatpush1.msra.mxu0 %v593
        %757 = vmatprep.subr.mxu0 0.0
        %758 = vmatpush2.msra.mxu0 0.0
        %759 = vmatprep.subr.mxu0 0.0
        %760 = vmatpush2.msra.mxu0 0.0
        %761 = vmatprep.subr.mxu0 0.0
        %762 = vmatpush2.msra.mxu0 0.0
        %763 = vmatprep.subr.mxu0 0.0
        %764 = vmatpush2.msra.mxu0 0.0
        %765 = vmatprep.subr.mxu0 0.0
        %766 = vmatpush2.msra.mxu0 0.0
        %767 = vmatprep.subr.mxu0 0.0
        %768 = vmatpush2.msra.mxu0 0.0
        %769 = vmatprep.subr.mxu0 0.0
        %770 = vmatpush2.msra.mxu0 0.0
        %771 = vmatprep.subr.mxu0 0.0
        %772 = vmatpush2.msra.mxu0 0.0
        %773 = vmatprep.subr.mxu0 0.0
        %774 = vmatpush2.msra.mxu0 0.0
        %775 = vmatprep.subr.mxu0 0.0
        %776 = vmatpush2.msra.mxu0 0.0
        %777 = vmatprep.subr.mxu0 0.0
        %778 = vmatpush2.msra.mxu0 0.0
        %779 = vmatprep.subr.mxu0 0.0
        %780 = vmatpush2.msra.mxu0 0.0
        %781 = vmatprep.subr.mxu0 0.0
        %782 = vmatpush2.msra.mxu0 0.0
        %783 = vmatprep.subr.mxu0 0.0
        %784 = vmatpush2.msra.mxu0 0.0
        %785 = vmatprep.subr.mxu0 0.0
        %786 = vmatpush2.msra.mxu0 0.0
        %787 = vmatprep.subr.mxu0 0.0
        %788 = vmatpush2.msra.mxu0 0.0
        %789 = vmatprep.mubr.f32.mxu0 0.0
        %790 = vmatmul.mubr.f32.gmra.mxu0 %v644
        %v791 = vpop.f32.mrf.mxu0
        %v792 = vadd.f32 %v636, %v791
        %v793 = vpop.f32.mrf.mxu0
        %v794 = vadd.f32 %v636, %v793
        %795 = vmatprep.mubr.f32.mxu0 0.0
        %796 = vmatmul.mubr.f32.gmra.mxu0 %v646
        %v797 = vpop.f32.mrf.mxu0
        %v798 = vadd.f32 %v641, %v797
        %v799 = vpop.f32.mrf.mxu0
        %v800 = vadd.f32 %v641, %v799
        %801 = vdwg.mxu0
        %v802 = vmax.f32 %v715, 0.0
        %v803 = vmax.f32 %v717, 0.0
        %v804 = vmax.f32 %v792, 0.0
        %v805 = vmax.f32 %v794, 0.0
        %v806 = vmax.f32 %v721, 0.0
        %v807 = vmax.f32 %v723, 0.0
        %v808 = vmax.f32 %v798, 0.0
        %v809 = vmax.f32 %v800, 0.0
        %v810 = vadd.f32 %v802, %v559
        %v811 = vadd.f32 %v803, %v560
        %v812 = vadd.f32 %v804, %v561
        %v813 = vadd.f32 %v805, %v562
        %v814 = vadd.f32 %v806, %v563
        %v815 = vadd.f32 %v807, %v564
        %v816 = vadd.f32 %v808, %v565
        %v817 = vadd.f32 %v809, %v566
        %818 = vrot.lane.b32.xlu0 %v810, 4
        %v819 = vpop.permute.xlu0 %818
        %820 = vrot.lane.b32.xlu0 %v814, 4
        %v821 = vpop.permute.xlu0 %820
        %822 = vrot.lane.b32.xlu0 %v811, 4
        %v823 = vpop.permute.xlu0 %822
        %824 = vrot.lane.b32.xlu0 %v815, 4
        %v825 = vpop.permute.xlu0 %824
        %826 = vrot.lane.b32.xlu0 %v812, 4
        %v827 = vpop.permute.xlu0 %826
        %828 = vrot.lane.b32.xlu0 %v816, 4
        %v829 = vpop.permute.xlu0 %828
        %830 = vrot.lane.b32.xlu0 %v813, 4
        %v831 = vpop.permute.xlu0 %830
        %832 = vrot.lane.b32.xlu0 %v817, 4
        %v833 = vpop.permute.xlu0 %832
        %vm834 = vcmp.lt.s32.totalorder %v176, 4
        %v835 = vsel %vm834, %v827, %v831
        %v836 = vsel %vm834, %v829, %v833
        %v837 = vsel %vm834, %v823, %v827
        %v838 = vsel %vm834, %v825, %v829
        %v839 = vsel %vm834, %v819, %v823
        %v840 = vsel %vm834, %v821, %v825
        %v841 = vsel %vm834, %v831, %v819
        %v842 = vsel %vm834, %v833, %v821
        %v843 = vsel %vm236, 1, 0
        %v844 = vsel %vm237, 1, 0
        %v845 = vsel %vm238, 1, 0
        %v846 = vsel %vm239, 1, 0
        %vm847 = vcmp.eq.s32.totalorder %v843, 1
        %vm848 = vcmp.eq.s32.totalorder %v844, 1
        %vm849 = vcmp.eq.s32.totalorder %v845, 1
        %vm850 = vcmp.eq.s32.totalorder %v846, 1
        %v851 = vsel %vm847, %v841, 0.0
        %v852 = vsel %vm848, %v839, 0.0
        %v853 = vsel %vm849, %v837, 0.0
        %v854 = vsel %vm850, %v835, 0.0
        %v855 = vsel %vm847, %v842, 0.0
        %v856 = vsel %vm848, %v840, 0.0
        %v857 = vsel %vm849, %v838, 0.0
        %v858 = vsel %vm850, %v836, 0.0
        %859 = vrot.lane.b32.xlu0 %v810, 124
        %v860 = vpop.permute.xlu0 %859
        %861 = vrot.lane.b32.xlu0 %v814, 124
        %v862 = vpop.permute.xlu0 %861
        %863 = vrot.lane.b32.xlu0 %v811, 124
        %v864 = vpop.permute.xlu0 %863
        %865 = vrot.lane.b32.xlu0 %v815, 124
        %v866 = vpop.permute.xlu0 %865
        %867 = vrot.lane.b32.xlu0 %v812, 124
        %v868 = vpop.permute.xlu0 %867
        %869 = vrot.lane.b32.xlu0 %v816, 124
        %v870 = vpop.permute.xlu0 %869
        %871 = vrot.lane.b32.xlu0 %v813, 124
        %v872 = vpop.permute.xlu0 %871
        %873 = vrot.lane.b32.xlu0 %v817, 124
        %v874 = vpop.permute.xlu0 %873
        %vm875 = vcmp.lt.s32.totalorder %v176, 124
        %v876 = vsel %vm875, %v868, %v872
        %v877 = vsel %vm875, %v870, %v874
        %v878 = vsel %vm875, %v864, %v868
        %v879 = vsel %vm875, %v866, %v870
        %v880 = vsel %vm875, %v860, %v864
        %v881 = vsel %vm875, %v862, %v866
        %v882 = vsel %vm875, %v872, %v860
        %v883 = vsel %vm875, %v874, %v862
        %v884 = vsel %vm280, 1, 0
        %v885 = vsel %vm281, 1, 0
        %v886 = vsel %vm282, 1, 0
        %v887 = vsel %vm283, 1, 0
        %vm888 = vcmp.eq.s32.totalorder %v884, 1
        %vm889 = vcmp.eq.s32.totalorder %v885, 1
        %vm890 = vcmp.eq.s32.totalorder %v886, 1
        %vm891 = vcmp.eq.s32.totalorder %v887, 1
        %v892 = vsel %vm888, %v880, 0.0
        %v893 = vsel %vm889, %v878, 0.0
        %v894 = vsel %vm890, %v876, 0.0
        %v895 = vsel %vm891, %v882, 0.0
        %v896 = vsel %vm888, %v881, 0.0
        %v897 = vsel %vm889, %v879, 0.0
        %v898 = vsel %vm890, %v877, 0.0
        %v899 = vsel %vm891, %v883, 0.0
        %v900 = vld [vmem:[#allocation5 + $0x40] sm:$0xff]
        %v901 = vld [vmem:[#allocation5 + $0x50] sm:$0xff]
        %903 = vset.pattern.permute.xlu0 48
        %904 = vperm.xlu0 %903, %v900
        %v905 = vpop.permute.xlu0 %904
        %908 = vset.pattern.permute.xlu0 48
        %909 = vperm.xlu0 %908, %v901
        %v910 = vpop.permute.xlu0 %909
        %v912 = vsel %vm643, %v900, 0
        %v914 = vsel %vm643, %v901, 0
        %916 = vmatprep.subr.mxu0 0.0
        %917 = vmatpush1.msra.mxu0 0.0
        %918 = vmatprep.subr.mxu0 0.0
        %919 = vmatpush1.msra.mxu0 0.0
        %920 = vmatprep.subr.mxu0 0.0
        %921 = vmatpush1.msra.mxu0 0.0
        %922 = vmatprep.subr.mxu0 0.0
        %923 = vmatpush1.msra.mxu0 0.0
        %924 = vmatprep.subr.mxu0 0.0
        %925 = vmatpush1.msra.mxu0 0.0
        %926 = vmatprep.subr.mxu0 0.0
        %927 = vmatpush1.msra.mxu0 0.0
        %928 = vmatprep.subr.mxu0 0.0
        %929 = vmatpush1.msra.mxu0 0.0
        %930 = vmatprep.subr.mxu0 0.0
        %931 = vmatpush1.msra.mxu0 0.0
        %932 = vmatprep.subr.mxu0 0.0
        %933 = vmatpush1.msra.mxu0 0.0
        %934 = vmatprep.subr.mxu0 0.0
        %935 = vmatpush1.msra.mxu0 0.0
        %936 = vmatprep.subr.mxu0 %v897
        %937 = vmatpush1.msra.mxu0 %v896
        %938 = vmatprep.subr.mxu0 %v893
        %939 = vmatpush1.msra.mxu0 %v892
        %940 = vmatprep.subr.mxu0 %v815
        %941 = vmatpush1.msra.mxu0 %v814
        %942 = vmatprep.subr.mxu0 %v811
        %943 = vmatpush1.msra.mxu0 %v810
        %944 = vmatprep.subr.mxu0 %v856
        %945 = vmatpush1.msra.mxu0 %v855
        %946 = vmatprep.subr.mxu0 %v852
        %947 = vmatpush1.msra.mxu0 %v851
        %948 = vmatprep.subr.mxu0 0.0
        %949 = vmatpush2.msra.mxu0 0.0
        %950 = vmatprep.subr.mxu0 0.0
        %951 = vmatpush2.msra.mxu0 0.0
        %952 = vmatprep.subr.mxu0 0.0
        %953 = vmatpush2.msra.mxu0 0.0
        %954 = vmatprep.subr.mxu0 0.0
        %955 = vmatpush2.msra.mxu0 0.0
        %956 = vmatprep.subr.mxu0 0.0
        %957 = vmatpush2.msra.mxu0 0.0
        %958 = vmatprep.subr.mxu0 0.0
        %959 = vmatpush2.msra.mxu0 0.0
        %960 = vmatprep.subr.mxu0 0.0
        %961 = vmatpush2.msra.mxu0 0.0
        %962 = vmatprep.subr.mxu0 0.0
        %963 = vmatpush2.msra.mxu0 0.0
        %964 = vmatprep.subr.mxu0 0.0
        %965 = vmatpush2.msra.mxu0 0.0
        %966 = vmatprep.subr.mxu0 0.0
        %967 = vmatpush2.msra.mxu0 0.0
        %968 = vmatprep.subr.mxu0 0.0
        %969 = vmatpush2.msra.mxu0 0.0
        %970 = vmatprep.subr.mxu0 0.0
        %971 = vmatpush2.msra.mxu0 0.0
        %972 = vmatprep.subr.mxu0 0.0
        %973 = vmatpush2.msra.mxu0 0.0
        %974 = vmatprep.subr.mxu0 0.0
        %975 = vmatpush2.msra.mxu0 0.0
        %976 = vmatprep.subr.mxu0 0.0
        %977 = vmatpush2.msra.mxu0 0.0
        %978 = vmatprep.subr.mxu0 0.0
        %979 = vmatpush2.msra.mxu0 0.0
        %980 = vmatprep.mubr.f32.mxu0 0.0
        %981 = vmatmul.mubr.f32.gmra.mxu0 %v912
        %v982 = vpop.f32.mrf.mxu0
        %v983 = vadd.f32 %v905, %v982
        %v984 = vpop.f32.mrf.mxu0
        %v985 = vadd.f32 %v905, %v984
        %986 = vmatprep.mubr.f32.mxu0 0.0
        %987 = vmatmul.mubr.f32.gmra.mxu0 %v914
        %v988 = vpop.f32.mrf.mxu0
        %v989 = vadd.f32 %v910, %v988
        %v990 = vpop.f32.mrf.mxu0
        %v991 = vadd.f32 %v910, %v990
        %992 = vdwg.mxu0
        %993 = vmatprep.subr.mxu0 0.0
        %994 = vmatpush1.msra.mxu0 0.0
        %995 = vmatprep.subr.mxu0 0.0
        %996 = vmatpush1.msra.mxu0 0.0
        %997 = vmatprep.subr.mxu0 0.0
        %998 = vmatpush1.msra.mxu0 0.0
        %999 = vmatprep.subr.mxu0 0.0
        %1000 = vmatpush1.msra.mxu0 0.0
        %1001 = vmatprep.subr.mxu0 0.0
        %1002 = vmatpush1.msra.mxu0 0.0
        %1003 = vmatprep.subr.mxu0 0.0
        %1004 = vmatpush1.msra.mxu0 0.0
        %1005 = vmatprep.subr.mxu0 0.0
        %1006 = vmatpush1.msra.mxu0 0.0
        %1007 = vmatprep.subr.mxu0 0.0
        %1008 = vmatpush1.msra.mxu0 0.0
        %1009 = vmatprep.subr.mxu0 0.0
        %1010 = vmatpush1.msra.mxu0 0.0
        %1011 = vmatprep.subr.mxu0 0.0
        %1012 = vmatpush1.msra.mxu0 0.0
        %1013 = vmatprep.subr.mxu0 %v899
        %1014 = vmatpush1.msra.mxu0 %v898
        %1015 = vmatprep.subr.mxu0 %v895
        %1016 = vmatpush1.msra.mxu0 %v894
        %1017 = vmatprep.subr.mxu0 %v817
        %1018 = vmatpush1.msra.mxu0 %v816
        %1019 = vmatprep.subr.mxu0 %v813
        %1020 = vmatpush1.msra.mxu0 %v812
        %1021 = vmatprep.subr.mxu0 %v858
        %1022 = vmatpush1.msra.mxu0 %v857
        %1023 = vmatprep.subr.mxu0 %v854
        %1024 = vmatpush1.msra.mxu0 %v853
        %1025 = vmatprep.subr.mxu0 0.0
        %1026 = vmatpush2.msra.mxu0 0.0
        %1027 = vmatprep.subr.mxu0 0.0
        %1028 = vmatpush2.msra.mxu0 0.0
        %1029 = vmatprep.subr.mxu0 0.0
        %1030 = vmatpush2.msra.mxu0 0.0
        %1031 = vmatprep.subr.mxu0 0.0
        %1032 = vmatpush2.msra.mxu0 0.0
        %1033 = vmatprep.subr.mxu0 0.0
        %1034 = vmatpush2.msra.mxu0 0.0
        %1035 = vmatprep.subr.mxu0 0.0
        %1036 = vmatpush2.msra.mxu0 0.0
        %1037 = vmatprep.subr.mxu0 0.0
        %1038 = vmatpush2.msra.mxu0 0.0
        %1039 = vmatprep.subr.mxu0 0.0
        %1040 = vmatpush2.msra.mxu0 0.0
        %1041 = vmatprep.subr.mxu0 0.0
        %1042 = vmatpush2.msra.mxu0 0.0
        %1043 = vmatprep.subr.mxu0 0.0
        %1044 = vmatpush2.msra.mxu0 0.0
        %1045 = vmatprep.subr.mxu0 0.0
        %1046 = vmatpush2.msra.mxu0 0.0
        %1047 = vmatprep.subr.mxu0 0.0
        %1048 = vmatpush2.msra.mxu0 0.0
        %1049 = vmatprep.subr.mxu0 0.0
        %1050 = vmatpush2.msra.mxu0 0.0
        %1051 = vmatprep.subr.mxu0 0.0
        %1052 = vmatpush2.msra.mxu0 0.0
        %1053 = vmatprep.subr.mxu0 0.0
        %1054 = vmatpush2.msra.mxu0 0.0
        %1055 = vmatprep.subr.mxu0 0.0
        %1056 = vmatpush2.msra.mxu0 0.0
        %1057 = vmatprep.mubr.f32.mxu0 0.0
        %1058 = vmatmul.mubr.f32.gmra.mxu0 %v912
        %v1059 = vpop.f32.mrf.mxu0
        %v1060 = vadd.f32 %v905, %v1059
        %v1061 = vpop.f32.mrf.mxu0
        %v1062 = vadd.f32 %v905, %v1061
        %1063 = vmatprep.mubr.f32.mxu0 0.0
        %1064 = vmatmul.mubr.f32.gmra.mxu0 %v914
        %v1065 = vpop.f32.mrf.mxu0
        %v1066 = vadd.f32 %v910, %v1065
        %v1067 = vpop.f32.mrf.mxu0
        %v1068 = vadd.f32 %v910, %v1067
        %1069 = vdwg.mxu0
        %v1070 = vmax.f32 %v983, 0.0
        %v1071 = vmax.f32 %v985, 0.0
        %v1072 = vmax.f32 %v1060, 0.0
        %v1073 = vmax.f32 %v1062, 0.0
        %v1074 = vmax.f32 %v989, 0.0
        %v1075 = vmax.f32 %v991, 0.0
        %v1076 = vmax.f32 %v1066, 0.0
        %v1077 = vmax.f32 %v1068, 0.0
        %1078 = vrot.lane.b32.xlu0 %v1070, 120
        %v1079 = vpop.permute.xlu0 %1078
        %1080 = vrot.lane.b32.xlu0 %v1074, 120
        %v1081 = vpop.permute.xlu0 %1080
        %1082 = vrot.lane.b32.xlu0 %v1071, 120
        %v1083 = vpop.permute.xlu0 %1082
        %1084 = vrot.lane.b32.xlu0 %v1075, 120
        %v1085 = vpop.permute.xlu0 %1084
        %1086 = vrot.lane.b32.xlu0 %v1072, 120
        %v1087 = vpop.permute.xlu0 %1086
        %1088 = vrot.lane.b32.xlu0 %v1076, 120
        %v1089 = vpop.permute.xlu0 %1088
        %1090 = vrot.lane.b32.xlu0 %v1073, 120
        %v1091 = vpop.permute.xlu0 %1090
        %1092 = vrot.lane.b32.xlu0 %v1077, 120
        %v1093 = vpop.permute.xlu0 %1092
        %vm1094 = vcmp.lt.s32.totalorder %v176, 120
        %v1095 = vsel %vm1094, %v1087, %v1091
        %v1096 = vsel %vm1094, %v1089, %v1093
        %v1097 = vsel %vm1094, %v1083, %v1087
        %v1098 = vsel %vm1094, %v1085, %v1089
        %v1099 = vsel %vm1094, %v1079, %v1083
        %v1100 = vsel %vm1094, %v1081, %v1085
        %v1101 = vsel %vm1094, %v1091, %v1079
        %v1102 = vsel %vm1094, %v1093, %v1081
        %1103 = vrot.lane.b32.xlu0 %v1070, 119
        %v1104 = vpop.permute.xlu0 %1103
        %1105 = vrot.lane.b32.xlu0 %v1074, 119
        %v1106 = vpop.permute.xlu0 %1105
        %1107 = vrot.lane.b32.xlu0 %v1071, 119
        %v1108 = vpop.permute.xlu0 %1107
        %1109 = vrot.lane.b32.xlu0 %v1075, 119
        %v1110 = vpop.permute.xlu0 %1109
        %1111 = vrot.lane.b32.xlu0 %v1072, 119
        %v1112 = vpop.permute.xlu0 %1111
        %1113 = vrot.lane.b32.xlu0 %v1076, 119
        %v1114 = vpop.permute.xlu0 %1113
        %1115 = vrot.lane.b32.xlu0 %v1073, 119
        %v1116 = vpop.permute.xlu0 %1115
        %1117 = vrot.lane.b32.xlu0 %v1077, 119
        %v1118 = vpop.permute.xlu0 %1117
        %vm1119 = vcmp.lt.s32.totalorder %v176, 119
        %v1120 = vsel %vm1119, %v1112, %v1116
        %v1121 = vsel %vm1119, %v1114, %v1118
        %v1122 = vsel %vm1119, %v1108, %v1112
        %v1123 = vsel %vm1119, %v1110, %v1114
        %v1124 = vsel %vm1119, %v1104, %v1108
        %v1125 = vsel %vm1119, %v1106, %v1110
        %v1126 = vsel %vm1119, %v1116, %v1104
        %v1127 = vsel %vm1119, %v1118, %v1106
        %1128 = vrot.lane.b32.xlu0 %v1070, 118
        %v1129 = vpop.permute.xlu0 %1128
        %1130 = vrot.lane.b32.xlu0 %v1074, 118
        %v1131 = vpop.permute.xlu0 %1130
        %1132 = vrot.lane.b32.xlu0 %v1071, 118
        %v1133 = vpop.permute.xlu0 %1132
        %1134 = vrot.lane.b32.xlu0 %v1075, 118
        %v1135 = vpop.permute.xlu0 %1134
        %1136 = vrot.lane.b32.xlu0 %v1072, 118
        %v1137 = vpop.permute.xlu0 %1136
        %1138 = vrot.lane.b32.xlu0 %v1076, 118
        %v1139 = vpop.permute.xlu0 %1138
        %1140 = vrot.lane.b32.xlu0 %v1073, 118
        %v1141 = vpop.permute.xlu0 %1140
        %1142 = vrot.lane.b32.xlu0 %v1077, 118
        %v1143 = vpop.permute.xlu0 %1142
        %vm1144 = vcmp.lt.s32.totalorder %v176, 118
        %v1145 = vsel %vm1144, %v1137, %v1141
        %v1146 = vsel %vm1144, %v1139, %v1143
        %v1147 = vsel %vm1144, %v1133, %v1137
        %v1148 = vsel %vm1144, %v1135, %v1139
        %v1149 = vsel %vm1144, %v1129, %v1133
        %v1150 = vsel %vm1144, %v1131, %v1135
        %v1151 = vsel %vm1144, %v1141, %v1129
        %v1152 = vsel %vm1144, %v1143, %v1131
        %1153 = vrot.lane.b32.xlu0 %v1070, 117
        %v1154 = vpop.permute.xlu0 %1153
        %1155 = vrot.lane.b32.xlu0 %v1074, 117
        %v1156 = vpop.permute.xlu0 %1155
        %1157 = vrot.lane.b32.xlu0 %v1071, 117
        %v1158 = vpop.permute.xlu0 %1157
        %1159 = vrot.lane.b32.xlu0 %v1075, 117
        %v1160 = vpop.permute.xlu0 %1159
        %1161 = vrot.lane.b32.xlu0 %v1072, 117
        %v1162 = vpop.permute.xlu0 %1161
        %1163 = vrot.lane.b32.xlu0 %v1076, 117
        %v1164 = vpop.permute.xlu0 %1163
        %1165 = vrot.lane.b32.xlu0 %v1073, 117
        %v1166 = vpop.permute.xlu0 %1165
        %1167 = vrot.lane.b32.xlu0 %v1077, 117
        %v1168 = vpop.permute.xlu0 %1167
        %vm1169 = vcmp.lt.s32.totalorder %v176, 117
        %v1170 = vsel %vm1169, %v1162, %v1166
        %v1171 = vsel %vm1169, %v1164, %v1168
        %v1172 = vsel %vm1169, %v1158, %v1162
        %v1173 = vsel %vm1169, %v1160, %v1164
        %v1174 = vsel %vm1169, %v1154, %v1158
        %v1175 = vsel %vm1169, %v1156, %v1160
        %v1176 = vsel %vm1169, %v1166, %v1154
        %v1177 = vsel %vm1169, %v1168, %v1156
        %1178 = vrot.lane.b32.xlu0 %v1070, 116
        %v1179 = vpop.permute.xlu0 %1178
        %1180 = vrot.lane.b32.xlu0 %v1074, 116
        %v1181 = vpop.permute.xlu0 %1180
        %1182 = vrot.lane.b32.xlu0 %v1071, 116
        %v1183 = vpop.permute.xlu0 %1182
        %1184 = vrot.lane.b32.xlu0 %v1075, 116
        %v1185 = vpop.permute.xlu0 %1184
        %1186 = vrot.lane.b32.xlu0 %v1072, 116
        %v1187 = vpop.permute.xlu0 %1186
        %1188 = vrot.lane.b32.xlu0 %v1076, 116
        %v1189 = vpop.permute.xlu0 %1188
        %1190 = vrot.lane.b32.xlu0 %v1073, 116
        %v1191 = vpop.permute.xlu0 %1190
        %1192 = vrot.lane.b32.xlu0 %v1077, 116
        %v1193 = vpop.permute.xlu0 %1192
        %vm1194 = vcmp.lt.s32.totalorder %v176, 116
        %v1195 = vsel %vm1194, %v1187, %v1191
        %v1196 = vsel %vm1194, %v1189, %v1193
        %v1197 = vsel %vm1194, %v1183, %v1187
        %v1198 = vsel %vm1194, %v1185, %v1189
        %v1199 = vsel %vm1194, %v1179, %v1183
        %v1200 = vsel %vm1194, %v1181, %v1185
        %v1201 = vsel %vm1194, %v1191, %v1179
        %v1202 = vsel %vm1194, %v1193, %v1181
        %1203 = vrot.lane.b32.xlu0 %v1070, 115
        %v1204 = vpop.permute.xlu0 %1203
        %1205 = vrot.lane.b32.xlu0 %v1074, 115
        %v1206 = vpop.permute.xlu0 %1205
        %1207 = vrot.lane.b32.xlu0 %v1071, 115
        %v1208 = vpop.permute.xlu0 %1207
        %1209 = vrot.lane.b32.xlu0 %v1075, 115
        %v1210 = vpop.permute.xlu0 %1209
        %1211 = vrot.lane.b32.xlu0 %v1072, 115
        %v1212 = vpop.permute.xlu0 %1211
        %1213 = vrot.lane.b32.xlu0 %v1076, 115
        %v1214 = vpop.permute.xlu0 %1213
        %1215 = vrot.lane.b32.xlu0 %v1073, 115
        %v1216 = vpop.permute.xlu0 %1215
        %1217 = vrot.lane.b32.xlu0 %v1077, 115
        %v1218 = vpop.permute.xlu0 %1217
        %vm1219 = vcmp.lt.s32.totalorder %v176, 115
        %v1220 = vsel %vm1219, %v1212, %v1216
        %v1221 = vsel %vm1219, %v1214, %v1218
        %v1222 = vsel %vm1219, %v1208, %v1212
        %v1223 = vsel %vm1219, %v1210, %v1214
        %v1224 = vsel %vm1219, %v1204, %v1208
        %v1225 = vsel %vm1219, %v1206, %v1210
        %v1226 = vsel %vm1219, %v1216, %v1204
        %v1227 = vsel %vm1219, %v1218, %v1206
        %1228 = vrot.lane.b32.xlu0 %v1070, 114
        %v1229 = vpop.permute.xlu0 %1228
        %1230 = vrot.lane.b32.xlu0 %v1074, 114
        %v1231 = vpop.permute.xlu0 %1230
        %1232 = vrot.lane.b32.xlu0 %v1071, 114
        %v1233 = vpop.permute.xlu0 %1232
        %1234 = vrot.lane.b32.xlu0 %v1075, 114
        %v1235 = vpop.permute.xlu0 %1234
        %1236 = vrot.lane.b32.xlu0 %v1072, 114
        %v1237 = vpop.permute.xlu0 %1236
        %1238 = vrot.lane.b32.xlu0 %v1076, 114
        %v1239 = vpop.permute.xlu0 %1238
        %1240 = vrot.lane.b32.xlu0 %v1073, 114
        %v1241 = vpop.permute.xlu0 %1240
        %1242 = vrot.lane.b32.xlu0 %v1077, 114
        %v1243 = vpop.permute.xlu0 %1242
        %vm1244 = vcmp.lt.s32.totalorder %v176, 114
        %v1245 = vsel %vm1244, %v1237, %v1241
        %v1246 = vsel %vm1244, %v1239, %v1243
        %v1247 = vsel %vm1244, %v1233, %v1237
        %v1248 = vsel %vm1244, %v1235, %v1239
        %v1249 = vsel %vm1244, %v1229, %v1233
        %v1250 = vsel %vm1244, %v1231, %v1235
        %v1251 = vsel %vm1244, %v1241, %v1229
        %v1252 = vsel %vm1244, %v1243, %v1231
        %1253 = vrot.lane.b32.xlu0 %v1070, 113
        %v1254 = vpop.permute.xlu0 %1253
        %1255 = vrot.lane.b32.xlu0 %v1074, 113
        %v1256 = vpop.permute.xlu0 %1255
        %1257 = vrot.lane.b32.xlu0 %v1071, 113
        %v1258 = vpop.permute.xlu0 %1257
        %1259 = vrot.lane.b32.xlu0 %v1075, 113
        %v1260 = vpop.permute.xlu0 %1259
        %1261 = vrot.lane.b32.xlu0 %v1072, 113
        %v1262 = vpop.permute.xlu0 %1261
        %1263 = vrot.lane.b32.xlu0 %v1076, 113
        %v1264 = vpop.permute.xlu0 %1263
        %1265 = vrot.lane.b32.xlu0 %v1073, 113
        %v1266 = vpop.permute.xlu0 %1265
        %1267 = vrot.lane.b32.xlu0 %v1077, 113
        %v1268 = vpop.permute.xlu0 %1267
        %vm1269 = vcmp.lt.s32.totalorder %v176, 113
        %v1270 = vsel %vm1269, %v1262, %v1266
        %v1271 = vsel %vm1269, %v1264, %v1268
        %v1272 = vsel %vm1269, %v1258, %v1262
        %v1273 = vsel %vm1269, %v1260, %v1264
        %v1274 = vsel %vm1269, %v1254, %v1258
        %v1275 = vsel %vm1269, %v1256, %v1260
        %v1276 = vsel %vm1269, %v1266, %v1254
        %v1277 = vsel %vm1269, %v1268, %v1256
        %1278 = vrot.lane.b32.xlu0 %v1070, 112
        %v1279 = vpop.permute.xlu0 %1278
        %1280 = vrot.lane.b32.xlu0 %v1074, 112
        %v1281 = vpop.permute.xlu0 %1280
        %1282 = vrot.lane.b32.xlu0 %v1071, 112
        %v1283 = vpop.permute.xlu0 %1282
        %1284 = vrot.lane.b32.xlu0 %v1075, 112
        %v1285 = vpop.permute.xlu0 %1284
        %1286 = vrot.lane.b32.xlu0 %v1072, 112
        %v1287 = vpop.permute.xlu0 %1286
        %1288 = vrot.lane.b32.xlu0 %v1076, 112
        %v1289 = vpop.permute.xlu0 %1288
        %1290 = vrot.lane.b32.xlu0 %v1073, 112
        %v1291 = vpop.permute.xlu0 %1290
        %1292 = vrot.lane.b32.xlu0 %v1077, 112
        %v1293 = vpop.permute.xlu0 %1292
        %vm1294 = vcmp.lt.s32.totalorder %v176, 112
        %v1295 = vsel %vm1294, %v1287, %v1291
        %v1296 = vsel %vm1294, %v1289, %v1293
        %v1297 = vsel %vm1294, %v1283, %v1287
        %v1298 = vsel %vm1294, %v1285, %v1289
        %v1299 = vsel %vm1294, %v1279, %v1283
        %v1300 = vsel %vm1294, %v1281, %v1285
        %v1301 = vsel %vm1294, %v1291, %v1279
        %v1302 = vsel %vm1294, %v1293, %v1281
        %v1303 = vld [vmem:[#allocation5 + $0x60] sm:$0xff]
        %v1304 = vld [vmem:[#allocation5 + $0x68] sm:$0xff]
        %1306 = vset.pattern.permute.xlu0 16
        %1307 = vperm.xlu0 %1306, %v1304
        %v1308 = vpop.permute.xlu0 %1307
        %vm1310 = vcmask 130048
        %v1311 = vsel %vm1310, %v1304, 0
        %1313 = vmatprep.subr.mxu0 %v1273
        %1314 = vmatpush1.msra.mxu0 %v1275
        %1315 = vmatprep.subr.mxu0 %v1272
        %1316 = vmatpush1.msra.mxu0 %v1274
        %1317 = vmatprep.subr.mxu0 %v1248
        %1318 = vmatpush1.msra.mxu0 %v1250
        %1319 = vmatprep.subr.mxu0 %v1247
        %1320 = vmatpush1.msra.mxu0 %v1249
        %1321 = vmatprep.subr.mxu0 %v1223
        %1322 = vmatpush1.msra.mxu0 %v1225
        %1323 = vmatprep.subr.mxu0 %v1222
        %1324 = vmatpush1.msra.mxu0 %v1224
        %1325 = vmatprep.subr.mxu0 %v1198
        %1326 = vmatpush1.msra.mxu0 %v1200
        %1327 = vmatprep.subr.mxu0 %v1197
        %1328 = vmatpush1.msra.mxu0 %v1199
        %1329 = vmatprep.subr.mxu0 %v1173
        %1330 = vmatpush1.msra.mxu0 %v1175
        %1331 = vmatprep.subr.mxu0 %v1172
        %1332 = vmatpush1.msra.mxu0 %v1174
        %1333 = vmatprep.subr.mxu0 %v1148
        %1334 = vmatpush1.msra.mxu0 %v1150
        %1335 = vmatprep.subr.mxu0 %v1147
        %1336 = vmatpush1.msra.mxu0 %v1149
        %1337 = vmatprep.subr.mxu0 %v1123
        %1338 = vmatpush1.msra.mxu0 %v1125
        %1339 = vmatprep.subr.mxu0 %v1122
        %1340 = vmatpush1.msra.mxu0 %v1124
        %1341 = vmatprep.subr.mxu0 %v1098
        %1342 = vmatpush1.msra.mxu0 %v1100
        %1343 = vmatprep.subr.mxu0 %v1097
        %1344 = vmatpush1.msra.mxu0 %v1099
        %1345 = vmatprep.subr.mxu0 0.0
        %1346 = vmatpush2.msra.mxu0 0.0
        %1347 = vmatprep.subr.mxu0 0.0
        %1348 = vmatpush2.msra.mxu0 0.0
        %1349 = vmatprep.subr.mxu0 0.0
        %1350 = vmatpush2.msra.mxu0 0.0
        %1351 = vmatprep.subr.mxu0 0.0
        %1352 = vmatpush2.msra.mxu0 0.0
        %1353 = vmatprep.subr.mxu0 0.0
        %1354 = vmatpush2.msra.mxu0 0.0
        %1355 = vmatprep.subr.mxu0 0.0
        %1356 = vmatpush2.msra.mxu0 0.0
        %1357 = vmatprep.subr.mxu0 0.0
        %1358 = vmatpush2.msra.mxu0 0.0
        %1359 = vmatprep.subr.mxu0 0.0
        %1360 = vmatpush2.msra.mxu0 0.0
        %1361 = vmatprep.subr.mxu0 0.0
        %1362 = vmatpush2.msra.mxu0 0.0
        %1363 = vmatprep.subr.mxu0 0.0
        %1364 = vmatpush2.msra.mxu0 0.0
        %1365 = vmatprep.subr.mxu0 0.0
        %1366 = vmatpush2.msra.mxu0 0.0
        %1367 = vmatprep.subr.mxu0 0.0
        %1368 = vmatpush2.msra.mxu0 0.0
        %1369 = vmatprep.subr.mxu0 0.0
        %1370 = vmatpush2.msra.mxu0 0.0
        %1371 = vmatprep.subr.mxu0 0.0
        %1372 = vmatpush2.msra.mxu0 0.0
        %1373 = vmatprep.subr.mxu0 %v1298
        %1374 = vmatpush2.msra.mxu0 %v1300
        %1375 = vmatprep.subr.mxu0 %v1297
        %1376 = vmatpush2.msra.mxu0 %v1299
        %1377 = vmatprep.mubr.f32.mxu0 %v1311
        %1378 = vmatmul.mubr.f32.gmra.mxu0 %v1303
        %v1379 = vpop.f32.mrf.mxu0
        %v1380 = vadd.f32 %v1308, %v1379
        %v1381 = vpop.f32.mrf.mxu0
        %v1382 = vadd.f32 %v1308, %v1381
        %1383 = vdwg.mxu0
        %1384 = vmatprep.subr.mxu0 %v1277
        %1385 = vmatpush1.msra.mxu0 %v1271
        %1386 = vmatprep.subr.mxu0 %v1276
        %1387 = vmatpush1.msra.mxu0 %v1270
        %1388 = vmatprep.subr.mxu0 %v1252
        %1389 = vmatpush1.msra.mxu0 %v1246
        %1390 = vmatprep.subr.mxu0 %v1251
        %1391 = vmatpush1.msra.mxu0 %v1245
        %1392 = vmatprep.subr.mxu0 %v1227
        %1393 = vmatpush1.msra.mxu0 %v1221
        %1394 = vmatprep.subr.mxu0 %v1226
        %1395 = vmatpush1.msra.mxu0 %v1220
        %1396 = vmatprep.subr.mxu0 %v1202
        %1397 = vmatpush1.msra.mxu0 %v1196
        %1398 = vmatprep.subr.mxu0 %v1201
        %1399 = vmatpush1.msra.mxu0 %v1195
        %1400 = vmatprep.subr.mxu0 %v1177
        %1401 = vmatpush1.msra.mxu0 %v1171
        %1402 = vmatprep.subr.mxu0 %v1176
        %1403 = vmatpush1.msra.mxu0 %v1170
        %1404 = vmatprep.subr.mxu0 %v1152
        %1405 = vmatpush1.msra.mxu0 %v1146
        %1406 = vmatprep.subr.mxu0 %v1151
        %1407 = vmatpush1.msra.mxu0 %v1145
        %1408 = vmatprep.subr.mxu0 %v1127
        %1409 = vmatpush1.msra.mxu0 %v1121
        %1410 = vmatprep.subr.mxu0 %v1126
        %1411 = vmatpush1.msra.mxu0 %v1120
        %1412 = vmatprep.subr.mxu0 %v1102
        %1413 = vmatpush1.msra.mxu0 %v1096
        %1414 = vmatprep.subr.mxu0 %v1101
        %1415 = vmatpush1.msra.mxu0 %v1095
        %1416 = vmatprep.subr.mxu0 0.0
        %1417 = vmatpush2.msra.mxu0 0.0
        %1418 = vmatprep.subr.mxu0 0.0
        %1419 = vmatpush2.msra.mxu0 0.0
        %1420 = vmatprep.subr.mxu0 0.0
        %1421 = vmatpush2.msra.mxu0 0.0
        %1422 = vmatprep.subr.mxu0 0.0
        %1423 = vmatpush2.msra.mxu0 0.0
        %1424 = vmatprep.subr.mxu0 0.0
        %1425 = vmatpush2.msra.mxu0 0.0
        %1426 = vmatprep.subr.mxu0 0.0
        %1427 = vmatpush2.msra.mxu0 0.0
        %1428 = vmatprep.subr.mxu0 0.0
        %1429 = vmatpush2.msra.mxu0 0.0
        %1430 = vmatprep.subr.mxu0 0.0
        %1431 = vmatpush2.msra.mxu0 0.0
        %1432 = vmatprep.subr.mxu0 0.0
        %1433 = vmatpush2.msra.mxu0 0.0
        %1434 = vmatprep.subr.mxu0 0.0
        %1435 = vmatpush2.msra.mxu0 0.0
        %1436 = vmatprep.subr.mxu0 0.0
        %1437 = vmatpush2.msra.mxu0 0.0
        %1438 = vmatprep.subr.mxu0 0.0
        %1439 = vmatpush2.msra.mxu0 0.0
        %1440 = vmatprep.subr.mxu0 0.0
        %1441 = vmatpush2.msra.mxu0 0.0
        %1442 = vmatprep.subr.mxu0 0.0
        %1443 = vmatpush2.msra.mxu0 0.0
        %1444 = vmatprep.subr.mxu0 %v1302
        %1445 = vmatpush2.msra.mxu0 %v1296
        %1446 = vmatprep.subr.mxu0 %v1301
        %1447 = vmatpush2.msra.mxu0 %v1295
        %1448 = vmatprep.mubr.f32.mxu0 %v1311
        %1449 = vmatmul.mubr.f32.gmra.mxu0 %v1303
        %v1450 = vpop.f32.mrf.mxu0
        %v1451 = vadd.f32 %v1308, %v1450
        %v1452 = vpop.f32.mrf.mxu0
        %v1453 = vadd.f32 %v1308, %v1452
        %1454 = vdwg.mxu0
        %1455 = vst [vmem:[%s174] sm:$0xff] %v1380
        %1456 = vst [vmem:[%s174 + $0x8] sm:$0xff] %v1382
        %1457 = vst [vmem:[%s174 + $0x10] sm:$0xff] %v1451
        %1458 = vst [vmem:[%s174 + $0x18] sm:$0xff] %v1453
        %v1459 = vld [vmem:[#allocation5 + $0x70] sm:$0xff]
        %v1461 = vsel %vm1310, %v1459, 0
        %1463 = vmatprep.subr.mxu0 0.0
        %1464 = vmatpush1.msra.mxu0 0.0
        %1465 = vmatprep.subr.mxu0 0.0
        %1466 = vmatpush1.msra.mxu0 0.0
        %1467 = vmatprep.subr.mxu0 0.0
        %1468 = vmatpush1.msra.mxu0 0.0
        %1469 = vmatprep.subr.mxu0 0.0
        %1470 = vmatpush1.msra.mxu0 0.0
        %1471 = vmatprep.subr.mxu0 0.0
        %1472 = vmatpush1.msra.mxu0 0.0
        %1473 = vmatprep.subr.mxu0 0.0
        %1474 = vmatpush1.msra.mxu0 0.0
        %1475 = vmatprep.subr.mxu0 0.0
        %1476 = vmatpush1.msra.mxu0 0.0
        %1477 = vmatprep.subr.mxu0 0.0
        %1478 = vmatpush1.msra.mxu0 0.0
        %1479 = vmatprep.subr.mxu0 0.0
        %1480 = vmatpush1.msra.mxu0 0.0
        %1481 = vmatprep.subr.mxu0 0.0
        %1482 = vmatpush1.msra.mxu0 0.0
        %1483 = vmatprep.subr.mxu0 0.0
        %1484 = vmatpush1.msra.mxu0 0.0
        %1485 = vmatprep.subr.mxu0 0.0
        %1486 = vmatpush1.msra.mxu0 0.0
        %1487 = vmatprep.subr.mxu0 0.0
        %1488 = vmatpush1.msra.mxu0 0.0
        %1489 = vmatprep.subr.mxu0 0.0
        %1490 = vmatpush1.msra.mxu0 0.0
        %1491 = vmatprep.subr.mxu0 %v1075
        %1492 = vmatpush1.msra.mxu0 %v1074
        %1493 = vmatprep.subr.mxu0 %v1071
        %1494 = vmatpush1.msra.mxu0 %v1070
        %1495 = vmatprep.subr.mxu0 0.0
        %1496 = vmatpush2.msra.mxu0 0.0
        %1497 = vmatprep.subr.mxu0 0.0
        %1498 = vmatpush2.msra.mxu0 0.0
        %1499 = vmatprep.subr.mxu0 0.0
        %1500 = vmatpush2.msra.mxu0 0.0
        %1501 = vmatprep.subr.mxu0 0.0
        %1502 = vmatpush2.msra.mxu0 0.0
        %1503 = vmatprep.subr.mxu0 0.0
        %1504 = vmatpush2.msra.mxu0 0.0
        %1505 = vmatprep.subr.mxu0 0.0
        %1506 = vmatpush2.msra.mxu0 0.0
        %1507 = vmatprep.subr.mxu0 0.0
        %1508 = vmatpush2.msra.mxu0 0.0
        %1509 = vmatprep.subr.mxu0 0.0
        %1510 = vmatpush2.msra.mxu0 0.0
        %1511 = vmatprep.subr.mxu0 0.0
        %1512 = vmatpush2.msra.mxu0 0.0
        %1513 = vmatprep.subr.mxu0 0.0
        %1514 = vmatpush2.msra.mxu0 0.0
        %1515 = vmatprep.subr.mxu0 0.0
        %1516 = vmatpush2.msra.mxu0 0.0
        %1517 = vmatprep.subr.mxu0 0.0
        %1518 = vmatpush2.msra.mxu0 0.0
        %1519 = vmatprep.subr.mxu0 0.0
        %1520 = vmatpush2.msra.mxu0 0.0
        %1521 = vmatprep.subr.mxu0 0.0
        %1522 = vmatpush2.msra.mxu0 0.0
        %1523 = vmatprep.subr.mxu0 0.0
        %1524 = vmatpush2.msra.mxu0 0.0
        %1525 = vmatprep.subr.mxu0 0.0
        %1526 = vmatpush2.msra.mxu0 0.0
        %1527 = vmatprep.mubr.f32.mxu0 0.0
        %1528 = vmatmul.mubr.f32.gmra.mxu0 %v1461
        %v1529 = vpop.f32.mrf.mxu0
        %v1530 = vadd.f32 0.0, %v1529
        %v1531 = vpop.f32.mrf.mxu0
        %v1532 = vadd.f32 0.0, %v1531
        %1533 = vdwg.mxu0
        %1534 = vmatprep.subr.mxu0 0.0
        %1535 = vmatpush1.msra.mxu0 0.0
        %1536 = vmatprep.subr.mxu0 0.0
        %1537 = vmatpush1.msra.mxu0 0.0
        %1538 = vmatprep.subr.mxu0 0.0
        %1539 = vmatpush1.msra.mxu0 0.0
        %1540 = vmatprep.subr.mxu0 0.0
        %1541 = vmatpush1.msra.mxu0 0.0
        %1542 = vmatprep.subr.mxu0 0.0
        %1543 = vmatpush1.msra.mxu0 0.0
        %1544 = vmatprep.subr.mxu0 0.0
        %1545 = vmatpush1.msra.mxu0 0.0
        %1546 = vmatprep.subr.mxu0 0.0
        %1547 = vmatpush1.msra.mxu0 0.0
        %1548 = vmatprep.subr.mxu0 0.0
        %1549 = vmatpush1.msra.mxu0 0.0
        %1550 = vmatprep.subr.mxu0 0.0
        %1551 = vmatpush1.msra.mxu0 0.0
        %1552 = vmatprep.subr.mxu0 0.0
        %1553 = vmatpush1.msra.mxu0 0.0
        %1554 = vmatprep.subr.mxu0 0.0
        %1555 = vmatpush1.msra.mxu0 0.0
        %1556 = vmatprep.subr.mxu0 0.0
        %1557 = vmatpush1.msra.mxu0 0.0
        %1558 = vmatprep.subr.mxu0 0.0
        %1559 = vmatpush1.msra.mxu0 0.0
        %1560 = vmatprep.subr.mxu0 0.0
        %1561 = vmatpush1.msra.mxu0 0.0
        %1562 = vmatprep.subr.mxu0 %v1077
        %1563 = vmatpush1.msra.mxu0 %v1076
        %1564 = vmatprep.subr.mxu0 %v1073
        %1565 = vmatpush1.msra.mxu0 %v1072
        %1566 = vmatprep.subr.mxu0 0.0
        %1567 = vmatpush2.msra.mxu0 0.0
        %1568 = vmatprep.subr.mxu0 0.0
        %1569 = vmatpush2.msra.mxu0 0.0
        %1570 = vmatprep.subr.mxu0 0.0
        %1571 = vmatpush2.msra.mxu0 0.0
        %1572 = vmatprep.subr.mxu0 0.0
        %1573 = vmatpush2.msra.mxu0 0.0
        %1574 = vmatprep.subr.mxu0 0.0
        %1575 = vmatpush2.msra.mxu0 0.0
        %1576 = vmatprep.subr.mxu0 0.0
        %1577 = vmatpush2.msra.mxu0 0.0
        %1578 = vmatprep.subr.mxu0 0.0
        %1579 = vmatpush2.msra.mxu0 0.0
        %1580 = vmatprep.subr.mxu0 0.0
        %1581 = vmatpush2.msra.mxu0 0.0
        %1582 = vmatprep.subr.mxu0 0.0
        %1583 = vmatpush2.msra.mxu0 0.0
        %1584 = vmatprep.subr.mxu0 0.0
        %1585 = vmatpush2.msra.mxu0 0.0
        %1586 = vmatprep.subr.mxu0 0.0
        %1587 = vmatpush2.msra.mxu0 0.0
        %1588 = vmatprep.subr.mxu0 0.0
        %1589 = vmatpush2.msra.mxu0 0.0
        %1590 = vmatprep.subr.mxu0 0.0
        %1591 = vmatpush2.msra.mxu0 0.0
        %1592 = vmatprep.subr.mxu0 0.0
        %1593 = vmatpush2.msra.mxu0 0.0
        %1594 = vmatprep.subr.mxu0 0.0
        %1595 = vmatpush2.msra.mxu0 0.0
        %1596 = vmatprep.subr.mxu0 0.0
        %1597 = vmatpush2.msra.mxu0 0.0
        %1598 = vmatprep.mubr.f32.mxu0 0.0
        %1599 = vmatmul.mubr.f32.gmra.mxu0 %v1461
        %v1600 = vpop.f32.mrf.mxu0
        %v1601 = vadd.f32 0.0, %v1600
        %v1602 = vpop.f32.mrf.mxu0
        %v1603 = vadd.f32 0.0, %v1602
        %1604 = vdwg.mxu0
        %vm1605 = vcmp.ge.s32.totalorder %v224, 8
        %vm1606 = vcmp.ge.s32.totalorder %v225, 8
        %vm1607 = vcmp.ge.s32.totalorder %v226, 8
        %vm1608 = vcmp.ge.s32.totalorder %v227, 8
        %vm1609 = vcmp.lt.s32.totalorder %v224, 56
        %vm1610 = vcmp.lt.s32.totalorder %v225, 56
        %vm1611 = vcmp.lt.s32.totalorder %v226, 56
        %vm1612 = vcmp.lt.s32.totalorder %v227, 56
        %vm1613 = vmand %vm1605, %vm1609
        %vm1614 = vmand %vm1606, %vm1610
        %vm1615 = vmand %vm1607, %vm1611
        %vm1616 = vmand %vm1608, %vm1612
        %v1617 = vsel %vm1613, 0.020833334, 0.0
        %v1618 = vsel %vm1614, 0.020833334, 0.0
        %v1619 = vsel %vm1615, 0.020833334, 0.0
        %v1620 = vsel %vm1616, 0.020833334, 0.0
        %v1621 = vmul.f32 %v1530, %v1617
        %v1622 = vmul.f32 %v1532, %v1618
        %v1623 = vmul.f32 %v1601, %v1619
        %v1624 = vmul.f32 %v1603, %v1620
        %1625 = vst [vmem:[%s174 + $0x20] sm:$0xff] %v1621
        %1626 = vst [vmem:[%s174 + $0x28] sm:$0xff] %v1622
        %1627 = vst [vmem:[%s174 + $0x30] sm:$0xff] %v1623
        %1628 = vst [vmem:[%s174 + $0x38] sm:$0xff] %v1624
        %s1629 = sand.u32 %s75, 1
        %s1630 = scalar_lea.sflag [#allocation4], %s1629
        %s1631 = sand.u32 %s75, 1
        %s1632 = smul.addr %s1631, 64
        %s1633 = scalar_lea.vmem [#allocation7], %s1632
        // Predicated region
        $region37: #{tpu_custom_call.1} parent=27 // pred_check
          %p1634 = pneg %p85
        $region38: #{tpu_custom_call.1} parent=27 // pred_check_branch
          %1636 = sbr.rel (%p1634) target = $region40
        $region39: #{tpu_custom_call.1} parent=27 // pred_region
          %s1638 = ssub.s32 1024, 1024
          %1639 = vsyncadd %s1630, %s1638
          %s1640 = smul.addr %s20, 8
          %s1641 = smul.addr %s1640, 128
          %s1642 = scalar_lea.hbm %s2, %s1641
          %s1643 = sshll.u32 %s1633, 4
          %s1644 = int_to_ptr.vmem [resolvable:$true] %s1643
          %1649 = dma.vmem_to_hbm [thread:$0]  %s1644, 1024, %s1642, %s1630, 512, 512, 32
        $region40: #{tpu_custom_call.1} parent=27 // pred_fallthru
          _
      $region28: #{tpu_custom_call.1} parent=5 // pred_fallthru
        _
      %p1650 = scmp.le.s32.totalorder 2, %s15
      // Predicated region
      $region41: #{tpu_custom_call.1} parent=5 // pred_check
        %p1651 = pneg %p1650
      $region42: #{tpu_custom_call.1} parent=5 // pred_check_branch
        %1653 = sbr.rel (%p1651) target = $region44
      $region43: #{tpu_custom_call.1} parent=5 // pred_region
        %s1654 = ssub.s32 %s15, 2
        // Predicated region
        $region45: #{tpu_custom_call.1} parent=43 // pred_check
          %p1655 = pneg %p91
        $region46: #{tpu_custom_call.1} parent=43 // pred_check_branch
          %1657 = sbr.rel (%p1655) target = $region48
        $region47: #{tpu_custom_call.1} parent=43 // pred_region
          %s1658 = sand.u32 %s76, 1
          %s1659 = scalar_lea.sflag [#allocation4], %s1658
          %s1660 = sand.u32 %s76, 1
          %s1661 = smul.addr %s1660, 64
          %s1662 = scalar_lea.vmem [#allocation7], %s1661
          %1663 = dma.done %s1659, 1024
        $region48: #{tpu_custom_call.1} parent=43 // pred_fallthru
          _
      $region44: #{tpu_custom_call.1} parent=5 // pred_fallthru
        _
    $region6: #{tpu_custom_call.1} parent=1 // loop_footer
      %s19 = sadd.s32 1, %s15
    $region7: #{tpu_custom_call.1} parent=1 // loop_footer_branch
      %14 = sbr.rel target = $region3
    $region8: #{tpu_custom_call.1} parent=1 // loop_exit
      _
    %1664 = vsyncpa [#allocation3], 1
    %s1665 = scalar_lea.sflag [#allocation3], 1
    %1666 = vsyncpa %s1665, 1
    %1667 = vsyncpa [#allocation6], 1
    %1668 = vsyncpa [#allocation4], 1
    %s1669 = scalar_lea.sflag [#allocation4], 1
    %1670 = vsyncpa %s1669, 1

</llo_original>
